<compile_context>
chip_gen: v7x
topology: tpu7x:2x2x1
jax: 0.10.0
libtpu: 0.0.40
codegen_flags: <defaults>
</compile_context>

<pallas_src>
import functools
import math

import jax
import jax.numpy as jnp
from jax.experimental import pallas as pl
from jax.experimental.pallas import tpu as pltpu


# ----------------------------------------------------------------------------
# In-kernel math helpers (f32)
# ----------------------------------------------------------------------------
def _gelu_tanh(y):
    return 0.5 * y * (1.0 + jnp.tanh(0.7978845608028654 * (y + 0.044715 * y * y * y)))


def _layernorm(x, g, b, eps):
    # single-pass variance: E[x^2] - mean^2 (halves the cross-lane reduces)
    mu = jnp.mean(x, axis=-1, keepdims=True)
    var = jnp.maximum(jnp.mean(x * x, axis=-1, keepdims=True) - mu * mu, 0.0)
    return (x - mu) * jax.lax.rsqrt(var + eps) * g + b


# ----------------------------------------------------------------------------
# Fused encoder + pooler + classifier kernel.  grid = (num_layers,)
# h [B*S, D] is VMEM-resident scratch across all grid steps.
# ----------------------------------------------------------------------------
def _encoder_kernel(emb_ref, mb_ref, eg_ref, eb_ref,
                    wqkv_ref, bqkv_ref,
                    wo_ref, bo_ref, ln1g_ref, ln1b_ref,
                    fw1_ref, fb1_ref, fw2_ref, fb2_ref, ln2g_ref, ln2b_ref,
                    pw_ref, pb_ref, lw_ref, lb_ref, cw_ref, cb_ref,
                    out_ref, h_ref, *, B, S, H, eps):
    l = pl.program_id(0)
    BS, D = h_ref.shape
    Dh = D // H
    scale = 1.0 / math.sqrt(Dh)

    # Layer 0: embedding LayerNorm into the resident hidden-state scratch.
    @pl.when(l == 0)
    def _():
        h_ref[...] = _layernorm(emb_ref[...], eg_ref[...], eb_ref[...], eps)

    h = h_ref[...]                         # [B*S, D] f32, never leaves VMEM
    hb = h.astype(jnp.bfloat16)            # bf16 MXU operands, f32 accumulation

    def dense(xb, w_ref, b_ref):
        return jnp.dot(xb, w_ref[...], preferred_element_type=jnp.float32) + b_ref[...]

    # ---- self-attention block --------------------------------------------
    qkv = dense(hb, wqkv_ref, bqkv_ref)    # fused QKV: [B*S, 3D] f32, single MXU pass
    q = qkv[:, :D]
    k = qkv[:, D:2 * D]
    v = qkv[:, 2 * D:]

    mbias_b = mb_ref[...][:, None, :]      # [B, 1, S] additive -10000 pad bias (hoisted)

    ctx_heads = []
    for hh in range(H):                    # heads = Dh-wide lane slices (static unroll)
        sl = slice(hh * Dh, (hh + 1) * Dh)
        qh = q[:, sl].reshape(B, S, Dh).astype(jnp.bfloat16)
        kh = k[:, sl].reshape(B, S, Dh).astype(jnp.bfloat16)
        vh = v[:, sl].reshape(B, S, Dh).astype(jnp.bfloat16)
        s = jnp.einsum("bqd,bkd->bqk", qh, kh,
                       preferred_element_type=jnp.float32) * scale
        s = s + mbias_b                    # broadcast over query axis in-vreg
        s = s - jnp.max(s, axis=-1, keepdims=True)
        p = jnp.exp(s)
        p = p * pl.reciprocal(jnp.sum(p, axis=-1, keepdims=True), approx=True)
        ch = jnp.einsum("bqk,bkd->bqd", p.astype(jnp.bfloat16), vh,
                        preferred_element_type=jnp.float32)
        ctx_heads.append(ch.reshape(BS, Dh))
    ctx = jnp.concatenate(ctx_heads, axis=-1)                  # [B*S, D]

    attn_out = dense(ctx.astype(jnp.bfloat16), wo_ref, bo_ref)
    h1 = _layernorm(h + attn_out, ln1g_ref[...], ln1b_ref[...], eps)   # fused residual+LN

    # ---- feed-forward block ------------------------------------------------
    ff = _gelu_tanh(dense(h1.astype(jnp.bfloat16), fw1_ref, fb1_ref))
    ff = dense(ff.astype(jnp.bfloat16), fw2_ref, fb2_ref)
    h2 = _layernorm(h1 + ff, ln2g_ref[...], ln2b_ref[...], eps)        # fused residual+LN

    h_ref[...] = h2

    # ---- last layer: pooler + tanh(linear) + dropout(identity) + dense + log_softmax
    @pl.when(l == pl.num_programs(0) - 1)
    def _():
        cls = h2.reshape(B, S, D)[:, 0, :]                             # [B, D] CLS rows
        pooled = jnp.tanh(dense(cls.astype(jnp.bfloat16), pw_ref, pb_ref))
        hid = jnp.tanh(dense(pooled.astype(jnp.bfloat16), lw_ref, lb_ref))
        logits = dense(hid.astype(jnp.bfloat16), cw_ref, cb_ref)
        z = logits - jnp.max(logits, axis=-1, keepdims=True)
        out_ref[...] = z - jnp.log(jnp.sum(jnp.exp(z), axis=-1, keepdims=True))


# ----------------------------------------------------------------------------
# Forward pass: embedding gathers in XLA, everything else in one pallas_call.
# ----------------------------------------------------------------------------
def base_bert_forward(params, x, idx, *, n_heads):
    B, S = x.shape
    D = params["word_emb"].shape[1]
    BS = B * S
    L = params["wq"].shape[0]
    F = params["fw1"].shape[2]
    H1 = params["lin_w"].shape[1]
    C = params["cls_w"].shape[1]

    # (x != 1) pad mask -> tiny [B, S] additive bias, broadcast inside the kernel.
    mbias = (1.0 - (x != 1).astype(jnp.float32)) * -10000.0

    # Embedding gathers stay as XLA glue (data-dependent row gathers).
    pos = jnp.arange(S)
    emb = (params["word_emb"][x] + params["pos_emb"][pos][None, :, :]
           + params["type_emb"][idx]).reshape(BS, D)

    bf16 = lambda a: a.astype(jnp.bfloat16)          # MXU operands in bf16

    # Fused QKV projection: one [D, 3D] matmul per layer instead of three [D, D].
    wqkv = jnp.concatenate([params["wq"], params["wk"], params["wv"]], axis=2)   # [L, D, 3D]
    bqkv = jnp.concatenate([params["bq"], params["bk"], params["bv"]], axis=2)   # [L, 1, 3D]

    def whole(shape):          # resident for all grid steps (no re-DMA: constant index)
        return pl.BlockSpec(shape, lambda l, _s=len(shape): (0,) * _s)

    def per_layer(shape):      # [L, ...] stacked weights; layer l streamed per grid step
        return pl.BlockSpec((None,) + shape, lambda l, _s=len(shape): (l,) + (0,) * _s)

    in_specs = [
        whole((BS, D)), whole((B, S)), whole((1, D)), whole((1, D)),
        per_layer((D, 3 * D)), per_layer((1, 3 * D)),   # fused wqkv, bqkv
        per_layer((D, D)), per_layer((1, D)),           # wo, bo
        per_layer((1, D)), per_layer((1, D)),           # ln1 gamma, beta
        per_layer((D, F)), per_layer((1, F)),           # ffn w1, b1
        per_layer((F, D)), per_layer((1, D)),           # ffn w2, b2
        per_layer((1, D)), per_layer((1, D)),           # ln2 gamma, beta
        whole((D, D)), whole((1, D)),                   # BERT pooler
        whole((D, H1)), whole((1, H1)),                 # self.linear
        whole((H1, C)), whole((1, C)),                  # self.dense_layer
    ]
    args = (
        emb, mbias, params["emb_ln_g"], params["emb_ln_b"],
        bf16(wqkv), bqkv,
        bf16(params["wo"]), params["bo"],
        params["ln1_g"], params["ln1_b"],
        bf16(params["fw1"]), params["fb1"],
        bf16(params["fw2"]), params["fb2"],
        params["ln2_g"], params["ln2_b"],
        bf16(params["pooler_w"]), params["pooler_b"],
        bf16(params["lin_w"]), params["lin_b"],
        bf16(params["cls_w"]), params["cls_b"],
    )

    kernel = functools.partial(_encoder_kernel, B=B, S=S, H=n_heads, eps=1e-12)
    return pl.pallas_call(
        kernel,
        out_shape=jax.ShapeDtypeStruct((B, C), jnp.float32),
        grid_spec=pltpu.PrefetchScalarGridSpec(
            num_scalar_prefetch=0,
            grid=(L,),                                   # layer axis (sequential dependence)
            in_specs=in_specs,
            out_specs=pl.BlockSpec((B, C), lambda l: (0, 0)),
            scratch_shapes=[pltpu.VMEM((BS, D), jnp.float32)],   # resident hidden state
        ),
        compiler_params=pltpu.CompilerParams(
            dimension_semantics=("arbitrary",),          # layer l depends on l-1
            vmem_limit_bytes=32 * 1024 * 1024,           # safe budget on v5e/v6e and v7x (64 MiB phys)
        ),
    )(*args)


# ----------------------------------------------------------------------------
# Deterministic synthetic parameters (stacked [L, ...] per-layer weights).
# ----------------------------------------------------------------------------
def init_params(key, vocab, max_pos, type_vocab, d_bert, n_layers, d_ff,
                d_hidden, num_class):
    keys = iter(jax.random.split(key, 40))

    def w(shp):                 # ~1/sqrt(fan_in): keeps activations / logits O(1)
        return jax.random.normal(next(keys), shp, jnp.float32) / math.sqrt(shp[-2])

    def small(shp):
        return jax.random.normal(next(keys), shp, jnp.float32) * 0.02

    L, D, Fd, H1 = n_layers, d_bert, d_ff, d_hidden // 2
    return dict(
        word_emb=w((vocab, D)), pos_emb=w((max_pos, D)), type_emb=w((type_vocab, D)),
        emb_ln_g=1.0 + small((1, D)), emb_ln_b=small((1, D)),
        wq=w((L, D, D)), bq=small((L, 1, D)),
        wk=w((L, D, D)), bk=small((L, 1, D)),
        wv=w((L, D, D)), bv=small((L, 1, D)),
        wo=w((L, D, D)), bo=small((L, 1, D)),
        ln1_g=1.0 + small((L, 1, D)), ln1_b=small((L, 1, D)),
        fw1=w((L, D, Fd)), fb1=small((L, 1, Fd)),
        fw2=w((L, Fd, D)), fb2=small((L, 1, D)),
        ln2_g=1.0 + small((L, 1, D)), ln2_b=small((L, 1, D)),
        pooler_w=w((D, D)), pooler_b=small((1, D)),
        lin_w=w((D, H1)), lin_b=small((1, H1)),            # self.linear
        cls_w=w((H1, num_class)), cls_b=small((1, num_class)),  # self.dense_layer
    )


# ----------------------------------------------------------------------------
# Pure-JAX f32 reference (same math) for a correctness cross-check.
# ----------------------------------------------------------------------------
def reference_forward(params, x, idx, *, n_heads, eps=1e-12):
    B, S = x.shape
    D = params["word_emb"].shape[1]
    H, Dh = n_heads, params["word_emb"].shape[1] // n_heads
    L = params["wq"].shape[0]

    mbias = (1.0 - (x != 1).astype(jnp.float32)) * -10000.0
    pos = jnp.arange(S)
    h = params["word_emb"][x] + params["pos_emb"][pos][None] + params["type_emb"][idx]

    def ln(t, g, b):
        mu = jnp.mean(t, -1, keepdims=True)
        var = jnp.mean((t - mu) ** 2, -1, keepdims=True)
        return (t - mu) * jax.lax.rsqrt(var + eps) * g + b

    h = ln(h, params["emb_ln_g"], params["emb_ln_b"])
    for l in range(L):
        q = h @ params["wq"][l] + params["bq"][l]
        k = h @ params["wk"][l] + params["bk"][l]
        v = h @ params["wv"][l] + params["bv"][l]
        q = q.reshape(B, S, H, Dh).transpose(0, 2, 1, 3)
        k = k.reshape(B, S, H, Dh).transpose(0, 2, 1, 3)
        v = v.reshape(B, S, H, Dh).transpose(0, 2, 1, 3)
        s = jnp.einsum("bhqd,bhkd->bhqk", q, k) / math.sqrt(Dh) + mbias[:, None, None, :]
        p = jax.nn.softmax(s, axis=-1)
        ctx = jnp.einsum("bhqk,bhkd->bhqd", p, v).transpose(0, 2, 1, 3).reshape(B, S, D)
        h = ln(h + ctx @ params["wo"][l] + params["bo"][l],
               params["ln1_g"][l], params["ln1_b"][l])
        ff = _gelu_tanh(h @ params["fw1"][l] + params["fb1"][l]) @ params["fw2"][l] + params["fb2"][l]
        h = ln(h + ff, params["ln2_g"][l], params["ln2_b"][l])
    pooled = jnp.tanh(h[:, 0, :] @ params["pooler_w"] + params["pooler_b"])
    hid = jnp.tanh(pooled @ params["lin_w"] + params["lin_b"])
    logits = hid @ params["cls_w"] + params["cls_b"]
    return jax.nn.log_softmax(logits, axis=-1)


# ----------------------------------------------------------------------------
if __name__ == "__main__":
    B, S = 2, 8
    vocab, type_vocab = 64, 2
    d_bert, d_hidden, num_class = 32, 32, 4
    n_layers, n_heads, d_ff = 2, 2, 64

    key = jax.random.PRNGKey(0)
    k_tok, k_params = jax.random.split(key)

    x = jax.random.randint(k_tok, (B, S), 0, vocab, dtype=jnp.int32)
    x = x.at[:, -2:].set(1)                      # trailing pad tokens (id==1) exercise the mask
    idx = jnp.zeros((B, S), dtype=jnp.int32)     # token_type_ids

    params = init_params(k_params, vocab, S, type_vocab, d_bert, n_layers,
                         d_ff, d_hidden, num_class)

    fwd = jax.jit(functools.partial(base_bert_forward, n_heads=n_heads))
    out = jax.block_until_ready(fwd(params, x, idx))

    assert out.shape == (B, num_class), out.shape
    assert bool(jnp.all(jnp.isfinite(out)))
    # log_softmax sanity: rows sum to 1 in prob space
    assert bool(jnp.all(jnp.abs(jnp.sum(jnp.exp(out), axis=-1) - 1.0) < 1e-4))
    # cross-check vs pure-JAX f32 reference (kernel uses bf16 MXU operands -> small drift)
    ref = reference_forward(params, x, idx, n_heads=n_heads)
    assert bool(jnp.max(jnp.abs(out - ref)) < 5e-2), (out, ref)

    print("KERNEL_OK")
</pallas_src>

<mosaic_0001>
module attributes {stable_mosaic.version = 11 : i64} {
  func.func @_encoder_kernel(%arg0: i32, %arg1: memref<16x32xf32, #tpu.memory_space<vmem>>, %arg2: memref<2x8xf32, #tpu.memory_space<vmem>>, %arg3: memref<1x32xf32, #tpu.memory_space<vmem>>, %arg4: memref<1x32xf32, #tpu.memory_space<vmem>>, %arg5: memref<1x32x96xbf16, #tpu.memory_space<vmem>>, %arg6: memref<1x1x96xf32, #tpu.memory_space<vmem>>, %arg7: memref<1x32x32xbf16, #tpu.memory_space<vmem>>, %arg8: memref<1x1x32xf32, #tpu.memory_space<vmem>>, %arg9: memref<1x1x32xf32, #tpu.memory_space<vmem>>, %arg10: memref<1x1x32xf32, #tpu.memory_space<vmem>>, %arg11: memref<1x32x64xbf16, #tpu.memory_space<vmem>>, %arg12: memref<1x1x64xf32, #tpu.memory_space<vmem>>, %arg13: memref<1x64x32xbf16, #tpu.memory_space<vmem>>, %arg14: memref<1x1x32xf32, #tpu.memory_space<vmem>>, %arg15: memref<1x1x32xf32, #tpu.memory_space<vmem>>, %arg16: memref<1x1x32xf32, #tpu.memory_space<vmem>>, %arg17: memref<32x32xbf16, #tpu.memory_space<vmem>>, %arg18: memref<1x32xf32, #tpu.memory_space<vmem>>, %arg19: memref<32x16xbf16, #tpu.memory_space<vmem>>, %arg20: memref<1x16xf32, #tpu.memory_space<vmem>>, %arg21: memref<16x4xbf16, #tpu.memory_space<vmem>>, %arg22: memref<1x4xf32, #tpu.memory_space<vmem>>, %arg23: memref<2x4xf32, #tpu.memory_space<vmem>>, %arg24: memref<16x32xf32, #tpu.memory_space<vmem>>) attributes {dimension_semantics = [#tpu.dimension_semantics<arbitrary>], iteration_bounds = array<i64: 2>, scalar_prefetch = 0 : i64, scratch_operands = 1 : i64, tpu.core_type = #tpu.core_type<tc>, window_params = [{pipeline_mode = #tpu.pipeline_mode<synchronous>, transform_indices = @transform_0, window_bounds = array<i64: 16, 32>}, {pipeline_mode = #tpu.pipeline_mode<synchronous>, transform_indices = @transform_1, window_bounds = array<i64: 2, 8>}, {pipeline_mode = #tpu.pipeline_mode<synchronous>, transform_indices = @transform_2, window_bounds = array<i64: 1, 32>}, {pipeline_mode = #tpu.pipeline_mode<synchronous>, transform_indices = @transform_3, window_bounds = array<i64: 1, 32>}, {transform_indices = @transform_4, window_bounds = array<i64: 1, 32, 96>}, {transform_indices = @transform_5, window_bounds = array<i64: 1, 1, 96>}, {transform_indices = @transform_6, window_bounds = array<i64: 1, 32, 32>}, {transform_indices = @transform_7, window_bounds = array<i64: 1, 1, 32>}, {transform_indices = @transform_8, window_bounds = array<i64: 1, 1, 32>}, {transform_indices = @transform_9, window_bounds = array<i64: 1, 1, 32>}, {transform_indices = @transform_10, window_bounds = array<i64: 1, 32, 64>}, {transform_indices = @transform_11, window_bounds = array<i64: 1, 1, 64>}, {transform_indices = @transform_12, window_bounds = array<i64: 1, 64, 32>}, {transform_indices = @transform_13, window_bounds = array<i64: 1, 1, 32>}, {transform_indices = @transform_14, window_bounds = array<i64: 1, 1, 32>}, {transform_indices = @transform_15, window_bounds = array<i64: 1, 1, 32>}, {pipeline_mode = #tpu.pipeline_mode<synchronous>, transform_indices = @transform_16, window_bounds = array<i64: 32, 32>}, {pipeline_mode = #tpu.pipeline_mode<synchronous>, transform_indices = @transform_17, window_bounds = array<i64: 1, 32>}, {pipeline_mode = #tpu.pipeline_mode<synchronous>, transform_indices = @transform_18, window_bounds = array<i64: 32, 16>}, {pipeline_mode = #tpu.pipeline_mode<synchronous>, transform_indices = @transform_19, window_bounds = array<i64: 1, 16>}, {pipeline_mode = #tpu.pipeline_mode<synchronous>, transform_indices = @transform_20, window_bounds = array<i64: 16, 4>}, {pipeline_mode = #tpu.pipeline_mode<synchronous>, transform_indices = @transform_21, window_bounds = array<i64: 1, 4>}, {pipeline_mode = #tpu.pipeline_mode<synchronous>, transform_indices = @transform_22, window_bounds = array<i64: 2, 4>}]} {
    %c0_i32 = arith.constant 0 : i32
    %0 = arith.cmpi eq, %arg0, %c0_i32 : i32
    %1 = arith.extui %0 : i1 to i32
    %c0_i32_0 = arith.constant 0 : i32
    %2 = arith.cmpi ne, %1, %c0_i32_0 : i32
    scf.if %2 {
      %c0_72 = arith.constant 0 : index
      %c0_73 = arith.constant 0 : index
      %171 = vector.load %arg1[%c0_72, %c0_73] : memref<16x32xf32, #tpu.memory_space<vmem>>, vector<16x32xf32>
      %c0_74 = arith.constant 0 : index
      %c0_75 = arith.constant 0 : index
      %172 = vector.load %arg3[%c0_74, %c0_75] : memref<1x32xf32, #tpu.memory_space<vmem>>, vector<1x32xf32>
      %c0_76 = arith.constant 0 : index
      %c0_77 = arith.constant 0 : index
      %173 = vector.load %arg4[%c0_76, %c0_77] : memref<1x32xf32, #tpu.memory_space<vmem>>, vector<1x32xf32>
      %cst_78 = arith.constant dense<0.000000e+00> : vector<16xf32>
      %174 = vector.multi_reduction <add>, %171, %cst_78 [1] : vector<16x32xf32> to vector<16xf32>
      %175 = vector.shape_cast %174 : vector<16xf32> to vector<16x1xf32>
      %cst_79 = arith.constant 3.200000e+01 : f32
      %176 = vector.broadcast %cst_79 : f32 to vector<16x1xf32>
      %177 = arith.divf %175, %176 : vector<16x1xf32>
      %178 = arith.mulf %171, %171 : vector<16x32xf32>
      %cst_80 = arith.constant dense<0.000000e+00> : vector<16xf32>
      %179 = vector.multi_reduction <add>, %178, %cst_80 [1] : vector<16x32xf32> to vector<16xf32>
      %180 = vector.shape_cast %179 : vector<16xf32> to vector<16x1xf32>
      %cst_81 = arith.constant 3.200000e+01 : f32
      %181 = vector.broadcast %cst_81 : f32 to vector<16x1xf32>
      %182 = arith.divf %180, %181 : vector<16x1xf32>
      %183 = arith.mulf %177, %177 : vector<16x1xf32>
      %184 = arith.subf %182, %183 : vector<16x1xf32>
      %cst_82 = arith.constant 0.000000e+00 : f32
      %185 = vector.broadcast %cst_82 : f32 to vector<16x1xf32>
      %186 = arith.maximumf %184, %185 : vector<16x1xf32>
      %187 = vector.broadcast %177 : vector<16x1xf32> to vector<16x32xf32>
      %188 = arith.subf %171, %187 : vector<16x32xf32>
      %cst_83 = arith.constant 9.99999996E-13 : f32
      %189 = vector.broadcast %cst_83 : f32 to vector<16x1xf32>
      %190 = arith.addf %186, %189 : vector<16x1xf32>
      %191 = math.rsqrt %190 : vector<16x1xf32>
      %192 = vector.broadcast %191 : vector<16x1xf32> to vector<16x32xf32>
      %193 = arith.mulf %188, %192 : vector<16x32xf32>
      %194 = vector.broadcast %172 : vector<1x32xf32> to vector<16x32xf32>
      %195 = arith.mulf %193, %194 : vector<16x32xf32>
      %196 = vector.broadcast %173 : vector<1x32xf32> to vector<16x32xf32>
      %197 = arith.addf %195, %196 : vector<16x32xf32>
      %c0_84 = arith.constant 0 : index
      %c0_85 = arith.constant 0 : index
      %198 = vector.load %arg24[%c0_84, %c0_85] : memref<16x32xf32, #tpu.memory_space<vmem>>, vector<16x32xf32>
      tpu.vector_store %arg24[%c0_84, %c0_85], %197 {strides = array<i32>} : memref<16x32xf32, #tpu.memory_space<vmem>>, vector<16x32xf32>,
    } else {
    }
    %c0 = arith.constant 0 : index
    %c0_1 = arith.constant 0 : index
    %3 = vector.load %arg24[%c0, %c0_1] : memref<16x32xf32, #tpu.memory_space<vmem>>, vector<16x32xf32>
    %4 = arith.truncf %3 : vector<16x32xf32> to vector<16x32xbf16>
    %c0_2 = arith.constant 0 : index
    %c0_3 = arith.constant 0 : index
    %c0_4 = arith.constant 0 : index
    %5 = vector.load %arg5[%c0_2, %c0_3, %c0_4] : memref<1x32x96xbf16, #tpu.memory_space<vmem>>, vector<1x32x96xbf16>
    %6 = vector.shape_cast %5 : vector<1x32x96xbf16> to vector<32x96xbf16>
    %cst = arith.constant dense<0.000000e+00> : vector<16x96xf32>
    %7 = tpu.matmul %4, %6, %cst {dimension_numbers = #tpu.dot_dimension_numbers<[1], [0], [0], [1], [0, 0, 1, 1], [], []>} : vector<16x32xbf16>, vector<32x96xbf16>, vector<16x96xf32> -> vector<16x96xf32>
    %c0_5 = arith.constant 0 : index
    %c0_6 = arith.constant 0 : index
    %c0_7 = arith.constant 0 : index
    %8 = vector.load %arg6[%c0_5, %c0_6, %c0_7] : memref<1x1x96xf32, #tpu.memory_space<vmem>>, vector<1x1x96xf32>
    %9 = vector.shape_cast %8 : vector<1x1x96xf32> to vector<1x96xf32>
    %10 = vector.broadcast %9 : vector<1x96xf32> to vector<16x96xf32>
    %11 = arith.addf %7, %10 : vector<16x96xf32>
    %12 = vector.extract_strided_slice %11 {offsets = [0, 0], sizes = [16, 32], strides = [1, 1]} : vector<16x96xf32> to vector<16x32xf32>
    %13 = vector.extract_strided_slice %11 {offsets = [0, 32], sizes = [16, 32], strides = [1, 1]} : vector<16x96xf32> to vector<16x32xf32>
    %14 = vector.extract_strided_slice %11 {offsets = [0, 64], sizes = [16, 32], strides = [1, 1]} : vector<16x96xf32> to vector<16x32xf32>
    %c0_8 = arith.constant 0 : index
    %c0_9 = arith.constant 0 : index
    %15 = vector.load %arg2[%c0_8, %c0_9] : memref<2x8xf32, #tpu.memory_space<vmem>>, vector<2x8xf32>
    %16 = vector.shape_cast %15 : vector<2x8xf32> to vector<2x1x8xf32>
    %17 = vector.extract_strided_slice %12 {offsets = [0, 0], sizes = [16, 16], strides = [1, 1]} : vector<16x32xf32> to vector<16x16xf32>
    %18 = vector.shape_cast %17 : vector<16x16xf32> to vector<2x8x16xf32>
    %19 = arith.truncf %18 : vector<2x8x16xf32> to vector<2x8x16xbf16>
    %20 = vector.extract_strided_slice %13 {offsets = [0, 0], sizes = [16, 16], strides = [1, 1]} : vector<16x32xf32> to vector<16x16xf32>
    %21 = vector.shape_cast %20 : vector<16x16xf32> to vector<2x8x16xf32>
    %22 = arith.truncf %21 : vector<2x8x16xf32> to vector<2x8x16xbf16>
    %23 = vector.extract_strided_slice %14 {offsets = [0, 0], sizes = [16, 16], strides = [1, 1]} : vector<16x32xf32> to vector<16x16xf32>
    %24 = vector.shape_cast %23 : vector<16x16xf32> to vector<2x8x16xf32>
    %25 = arith.truncf %24 : vector<2x8x16xf32> to vector<2x8x16xbf16>
    "tpu.trace_start"() <{level = 10 : i32, message = "bqd,bkd->bqk"}> : () -> ()
    %cst_10 = arith.constant dense<0.000000e+00> : vector<2x8x8xf32>
    %26 = tpu.matmul %19, %22, %cst_10 {dimension_numbers = #tpu.dot_dimension_numbers<[2], [2], [1], [1], [0, 0, 0, 1, 1, 1], [0], [0]>} : vector<2x8x16xbf16>, vector<2x8x16xbf16>, vector<2x8x8xf32> -> vector<2x8x8xf32>
    "tpu.trace_stop"() : () -> ()
    %cst_11 = arith.constant 2.500000e-01 : f32
    %27 = vector.broadcast %cst_11 : f32 to vector<2x8x8xf32>
    %28 = arith.mulf %26, %27 : vector<2x8x8xf32>
    %29 = vector.broadcast %16 : vector<2x1x8xf32> to vector<2x8x8xf32>
    %30 = arith.addf %28, %29 : vector<2x8x8xf32>
    %cst_12 = arith.constant dense<0xFF800000> : vector<2x8xf32>
    %31 = vector.multi_reduction <maximumf>, %30, %cst_12 [2] : vector<2x8x8xf32> to vector<2x8xf32>
    %32 = vector.shape_cast %31 : vector<2x8xf32> to vector<2x8x1xf32>
    %33 = vector.broadcast %32 : vector<2x8x1xf32> to vector<2x8x8xf32>
    %34 = arith.subf %30, %33 : vector<2x8x8xf32>
    %35 = math.exp %34 : vector<2x8x8xf32>
    %cst_13 = arith.constant dense<0.000000e+00> : vector<2x8xf32>
    %36 = vector.multi_reduction <add>, %35, %cst_13 [2] : vector<2x8x8xf32> to vector<2x8xf32>
    %37 = vector.shape_cast %36 : vector<2x8xf32> to vector<2x8x1xf32>
    %38 = tpu.reciprocal %37 {approx = true} : vector<2x8x1xf32> -> vector<2x8x1xf32>
    %39 = vector.broadcast %38 : vector<2x8x1xf32> to vector<2x8x8xf32>
    %40 = arith.mulf %35, %39 : vector<2x8x8xf32>
    %41 = arith.truncf %40 : vector<2x8x8xf32> to vector<2x8x8xbf16>
    "tpu.trace_start"() <{level = 10 : i32, message = "bqk,bkd->bqd"}> : () -> ()
    %cst_14 = arith.constant dense<0.000000e+00> : vector<2x8x16xf32>
    %42 = tpu.matmul %41, %25, %cst_14 {dimension_numbers = #tpu.dot_dimension_numbers<[2], [1], [1], [2], [0, 0, 0, 1, 1, 2], [0], [0]>} : vector<2x8x8xbf16>, vector<2x8x16xbf16>, vector<2x8x16xf32> -> vector<2x8x16xf32>
    "tpu.trace_stop"() : () -> ()
    %43 = vector.shape_cast %42 : vector<2x8x16xf32> to vector<16x16xf32>
    %44 = vector.extract_strided_slice %12 {offsets = [0, 16], sizes = [16, 16], strides = [1, 1]} : vector<16x32xf32> to vector<16x16xf32>
    %45 = vector.shape_cast %44 : vector<16x16xf32> to vector<2x8x16xf32>
    %46 = arith.truncf %45 : vector<2x8x16xf32> to vector<2x8x16xbf16>
    %47 = vector.extract_strided_slice %13 {offsets = [0, 16], sizes = [16, 16], strides = [1, 1]} : vector<16x32xf32> to vector<16x16xf32>
    %48 = vector.shape_cast %47 : vector<16x16xf32> to vector<2x8x16xf32>
    %49 = arith.truncf %48 : vector<2x8x16xf32> to vector<2x8x16xbf16>
    %50 = vector.extract_strided_slice %14 {offsets = [0, 16], sizes = [16, 16], strides = [1, 1]} : vector<16x32xf32> to vector<16x16xf32>
    %51 = vector.shape_cast %50 : vector<16x16xf32> to vector<2x8x16xf32>
    %52 = arith.truncf %51 : vector<2x8x16xf32> to vector<2x8x16xbf16>
    "tpu.trace_start"() <{level = 10 : i32, message = "bqd,bkd->bqk"}> : () -> ()
    %cst_15 = arith.constant dense<0.000000e+00> : vector<2x8x8xf32>
    %53 = tpu.matmul %46, %49, %cst_15 {dimension_numbers = #tpu.dot_dimension_numbers<[2], [2], [1], [1], [0, 0, 0, 1, 1, 1], [0], [0]>} : vector<2x8x16xbf16>, vector<2x8x16xbf16>, vector<2x8x8xf32> -> vector<2x8x8xf32>
    "tpu.trace_stop"() : () -> ()
    %cst_16 = arith.constant 2.500000e-01 : f32
    %54 = vector.broadcast %cst_16 : f32 to vector<2x8x8xf32>
    %55 = arith.mulf %53, %54 : vector<2x8x8xf32>
    %56 = vector.broadcast %16 : vector<2x1x8xf32> to vector<2x8x8xf32>
    %57 = arith.addf %55, %56 : vector<2x8x8xf32>
    %cst_17 = arith.constant dense<0xFF800000> : vector<2x8xf32>
    %58 = vector.multi_reduction <maximumf>, %57, %cst_17 [2] : vector<2x8x8xf32> to vector<2x8xf32>
    %59 = vector.shape_cast %58 : vector<2x8xf32> to vector<2x8x1xf32>
    %60 = vector.broadcast %59 : vector<2x8x1xf32> to vector<2x8x8xf32>
    %61 = arith.subf %57, %60 : vector<2x8x8xf32>
    %62 = math.exp %61 : vector<2x8x8xf32>
    %cst_18 = arith.constant dense<0.000000e+00> : vector<2x8xf32>
    %63 = vector.multi_reduction <add>, %62, %cst_18 [2] : vector<2x8x8xf32> to vector<2x8xf32>
    %64 = vector.shape_cast %63 : vector<2x8xf32> to vector<2x8x1xf32>
    %65 = tpu.reciprocal %64 {approx = true} : vector<2x8x1xf32> -> vector<2x8x1xf32>
    %66 = vector.broadcast %65 : vector<2x8x1xf32> to vector<2x8x8xf32>
    %67 = arith.mulf %62, %66 : vector<2x8x8xf32>
    %68 = arith.truncf %67 : vector<2x8x8xf32> to vector<2x8x8xbf16>
    "tpu.trace_start"() <{level = 10 : i32, message = "bqk,bkd->bqd"}> : () -> ()
    %cst_19 = arith.constant dense<0.000000e+00> : vector<2x8x16xf32>
    %69 = tpu.matmul %68, %52, %cst_19 {dimension_numbers = #tpu.dot_dimension_numbers<[2], [1], [1], [2], [0, 0, 0, 1, 1, 2], [0], [0]>} : vector<2x8x8xbf16>, vector<2x8x16xbf16>, vector<2x8x16xf32> -> vector<2x8x16xf32>
    "tpu.trace_stop"() : () -> ()
    %70 = vector.shape_cast %69 : vector<2x8x16xf32> to vector<16x16xf32>
    %71 = tpu.concatenate %43, %70 in 1 : vector<16x16xf32>, vector<16x16xf32> -> vector<16x32xf32>
    %72 = arith.truncf %71 : vector<16x32xf32> to vector<16x32xbf16>
    %c0_20 = arith.constant 0 : index
    %c0_21 = arith.constant 0 : index
    %c0_22 = arith.constant 0 : index
    %73 = vector.load %arg7[%c0_20, %c0_21, %c0_22] : memref<1x32x32xbf16, #tpu.memory_space<vmem>>, vector<1x32x32xbf16>
    %74 = vector.shape_cast %73 : vector<1x32x32xbf16> to vector<32x32xbf16>
    %cst_23 = arith.constant dense<0.000000e+00> : vector<16x32xf32>
    %75 = tpu.matmul %72, %74, %cst_23 {dimension_numbers = #tpu.dot_dimension_numbers<[1], [0], [0], [1], [0, 0, 1, 1], [], []>} : vector<16x32xbf16>, vector<32x32xbf16>, vector<16x32xf32> -> vector<16x32xf32>
    %c0_24 = arith.constant 0 : index
    %c0_25 = arith.constant 0 : index
    %c0_26 = arith.constant 0 : index
    %76 = vector.load %arg8[%c0_24, %c0_25, %c0_26] : memref<1x1x32xf32, #tpu.memory_space<vmem>>, vector<1x1x32xf32>
    %77 = vector.shape_cast %76 : vector<1x1x32xf32> to vector<1x32xf32>
    %78 = vector.broadcast %77 : vector<1x32xf32> to vector<16x32xf32>
    %79 = arith.addf %75, %78 : vector<16x32xf32>
    %80 = arith.addf %3, %79 : vector<16x32xf32>
    %c0_27 = arith.constant 0 : index
    %c0_28 = arith.constant 0 : index
    %c0_29 = arith.constant 0 : index
    %81 = vector.load %arg9[%c0_27, %c0_28, %c0_29] : memref<1x1x32xf32, #tpu.memory_space<vmem>>, vector<1x1x32xf32>
    %82 = vector.shape_cast %81 : vector<1x1x32xf32> to vector<1x32xf32>
    %c0_30 = arith.constant 0 : index
    %c0_31 = arith.constant 0 : index
    %c0_32 = arith.constant 0 : index
    %83 = vector.load %arg10[%c0_30, %c0_31, %c0_32] : memref<1x1x32xf32, #tpu.memory_space<vmem>>, vector<1x1x32xf32>
    %84 = vector.shape_cast %83 : vector<1x1x32xf32> to vector<1x32xf32>
    %cst_33 = arith.constant dense<0.000000e+00> : vector<16xf32>
    %85 = vector.multi_reduction <add>, %80, %cst_33 [1] : vector<16x32xf32> to vector<16xf32>
    %86 = vector.shape_cast %85 : vector<16xf32> to vector<16x1xf32>
    %cst_34 = arith.constant 3.200000e+01 : f32
    %87 = vector.broadcast %cst_34 : f32 to vector<16x1xf32>
    %88 = arith.divf %86, %87 : vector<16x1xf32>
    %89 = arith.mulf %80, %80 : vector<16x32xf32>
    %cst_35 = arith.constant dense<0.000000e+00> : vector<16xf32>
    %90 = vector.multi_reduction <add>, %89, %cst_35 [1] : vector<16x32xf32> to vector<16xf32>
    %91 = vector.shape_cast %90 : vector<16xf32> to vector<16x1xf32>
    %cst_36 = arith.constant 3.200000e+01 : f32
    %92 = vector.broadcast %cst_36 : f32 to vector<16x1xf32>
    %93 = arith.divf %91, %92 : vector<16x1xf32>
    %94 = arith.mulf %88, %88 : vector<16x1xf32>
    %95 = arith.subf %93, %94 : vector<16x1xf32>
    %cst_37 = arith.constant 0.000000e+00 : f32
    %96 = vector.broadcast %cst_37 : f32 to vector<16x1xf32>
    %97 = arith.maximumf %95, %96 : vector<16x1xf32>
    %98 = vector.broadcast %88 : vector<16x1xf32> to vector<16x32xf32>
    %99 = arith.subf %80, %98 : vector<16x32xf32>
    %cst_38 = arith.constant 9.99999996E-13 : f32
    %100 = vector.broadcast %cst_38 : f32 to vector<16x1xf32>
    %101 = arith.addf %97, %100 : vector<16x1xf32>
    %102 = math.rsqrt %101 : vector<16x1xf32>
    %103 = vector.broadcast %102 : vector<16x1xf32> to vector<16x32xf32>
    %104 = arith.mulf %99, %103 : vector<16x32xf32>
    %105 = vector.broadcast %82 : vector<1x32xf32> to vector<16x32xf32>
    %106 = arith.mulf %104, %105 : vector<16x32xf32>
    %107 = vector.broadcast %84 : vector<1x32xf32> to vector<16x32xf32>
    %108 = arith.addf %106, %107 : vector<16x32xf32>
    %109 = arith.truncf %108 : vector<16x32xf32> to vector<16x32xbf16>
    %c0_39 = arith.constant 0 : index
    %c0_40 = arith.constant 0 : index
    %c0_41 = arith.constant 0 : index
    %110 = vector.load %arg11[%c0_39, %c0_40, %c0_41] : memref<1x32x64xbf16, #tpu.memory_space<vmem>>, vector<1x32x64xbf16>
    %111 = vector.shape_cast %110 : vector<1x32x64xbf16> to vector<32x64xbf16>
    %cst_42 = arith.constant dense<0.000000e+00> : vector<16x64xf32>
    %112 = tpu.matmul %109, %111, %cst_42 {dimension_numbers = #tpu.dot_dimension_numbers<[1], [0], [0], [1], [0, 0, 1, 1], [], []>} : vector<16x32xbf16>, vector<32x64xbf16>, vector<16x64xf32> -> vector<16x64xf32>
    %c0_43 = arith.constant 0 : index
    %c0_44 = arith.constant 0 : index
    %c0_45 = arith.constant 0 : index
    %113 = vector.load %arg12[%c0_43, %c0_44, %c0_45] : memref<1x1x64xf32, #tpu.memory_space<vmem>>, vector<1x1x64xf32>
    %114 = vector.shape_cast %113 : vector<1x1x64xf32> to vector<1x64xf32>
    %115 = vector.broadcast %114 : vector<1x64xf32> to vector<16x64xf32>
    %116 = arith.addf %112, %115 : vector<16x64xf32>
    %cst_46 = arith.constant 5.000000e-01 : f32
    %117 = vector.broadcast %cst_46 : f32 to vector<16x64xf32>
    %118 = arith.mulf %117, %116 : vector<16x64xf32>
    %cst_47 = arith.constant 4.471500e-02 : f32
    %119 = vector.broadcast %cst_47 : f32 to vector<16x64xf32>
    %120 = arith.mulf %119, %116 : vector<16x64xf32>
    %121 = arith.mulf %120, %116 : vector<16x64xf32>
    %122 = arith.mulf %121, %116 : vector<16x64xf32>
    %123 = arith.addf %116, %122 : vector<16x64xf32>
    %cst_48 = arith.constant 0.797884583 : f32
    %124 = vector.broadcast %cst_48 : f32 to vector<16x64xf32>
    %125 = arith.mulf %124, %123 : vector<16x64xf32>
    %126 = math.tanh %125 : vector<16x64xf32>
    %cst_49 = arith.constant 1.000000e+00 : f32
    %127 = vector.broadcast %cst_49 : f32 to vector<16x64xf32>
    %128 = arith.addf %127, %126 : vector<16x64xf32>
    %129 = arith.mulf %118, %128 : vector<16x64xf32>
    %130 = arith.truncf %129 : vector<16x64xf32> to vector<16x64xbf16>
    %c0_50 = arith.constant 0 : index
    %c0_51 = arith.constant 0 : index
    %c0_52 = arith.constant 0 : index
    %131 = vector.load %arg13[%c0_50, %c0_51, %c0_52] : memref<1x64x32xbf16, #tpu.memory_space<vmem>>, vector<1x64x32xbf16>
    %132 = vector.shape_cast %131 : vector<1x64x32xbf16> to vector<64x32xbf16>
    %cst_53 = arith.constant dense<0.000000e+00> : vector<16x32xf32>
    %133 = tpu.matmul %130, %132, %cst_53 {dimension_numbers = #tpu.dot_dimension_numbers<[1], [0], [0], [1], [0, 0, 1, 1], [], []>} : vector<16x64xbf16>, vector<64x32xbf16>, vector<16x32xf32> -> vector<16x32xf32>
    %c0_54 = arith.constant 0 : index
    %c0_55 = arith.constant 0 : index
    %c0_56 = arith.constant 0 : index
    %134 = vector.load %arg14[%c0_54, %c0_55, %c0_56] : memref<1x1x32xf32, #tpu.memory_space<vmem>>, vector<1x1x32xf32>
    %135 = vector.shape_cast %134 : vector<1x1x32xf32> to vector<1x32xf32>
    %136 = vector.broadcast %135 : vector<1x32xf32> to vector<16x32xf32>
    %137 = arith.addf %133, %136 : vector<16x32xf32>
    %138 = arith.addf %108, %137 : vector<16x32xf32>
    %c0_57 = arith.constant 0 : index
    %c0_58 = arith.constant 0 : index
    %c0_59 = arith.constant 0 : index
    %139 = vector.load %arg15[%c0_57, %c0_58, %c0_59] : memref<1x1x32xf32, #tpu.memory_space<vmem>>, vector<1x1x32xf32>
    %140 = vector.shape_cast %139 : vector<1x1x32xf32> to vector<1x32xf32>
    %c0_60 = arith.constant 0 : index
    %c0_61 = arith.constant 0 : index
    %c0_62 = arith.constant 0 : index
    %141 = vector.load %arg16[%c0_60, %c0_61, %c0_62] : memref<1x1x32xf32, #tpu.memory_space<vmem>>, vector<1x1x32xf32>
    %142 = vector.shape_cast %141 : vector<1x1x32xf32> to vector<1x32xf32>
    %cst_63 = arith.constant dense<0.000000e+00> : vector<16xf32>
    %143 = vector.multi_reduction <add>, %138, %cst_63 [1] : vector<16x32xf32> to vector<16xf32>
    %144 = vector.shape_cast %143 : vector<16xf32> to vector<16x1xf32>
    %cst_64 = arith.constant 3.200000e+01 : f32
    %145 = vector.broadcast %cst_64 : f32 to vector<16x1xf32>
    %146 = arith.divf %144, %145 : vector<16x1xf32>
    %147 = arith.mulf %138, %138 : vector<16x32xf32>
    %cst_65 = arith.constant dense<0.000000e+00> : vector<16xf32>
    %148 = vector.multi_reduction <add>, %147, %cst_65 [1] : vector<16x32xf32> to vector<16xf32>
    %149 = vector.shape_cast %148 : vector<16xf32> to vector<16x1xf32>
    %cst_66 = arith.constant 3.200000e+01 : f32
    %150 = vector.broadcast %cst_66 : f32 to vector<16x1xf32>
    %151 = arith.divf %149, %150 : vector<16x1xf32>
    %152 = arith.mulf %146, %146 : vector<16x1xf32>
    %153 = arith.subf %151, %152 : vector<16x1xf32>
    %cst_67 = arith.constant 0.000000e+00 : f32
    %154 = vector.broadcast %cst_67 : f32 to vector<16x1xf32>
    %155 = arith.maximumf %153, %154 : vector<16x1xf32>
    %156 = vector.broadcast %146 : vector<16x1xf32> to vector<16x32xf32>
    %157 = arith.subf %138, %156 : vector<16x32xf32>
    %cst_68 = arith.constant 9.99999996E-13 : f32
    %158 = vector.broadcast %cst_68 : f32 to vector<16x1xf32>
    %159 = arith.addf %155, %158 : vector<16x1xf32>
    %160 = math.rsqrt %159 : vector<16x1xf32>
    %161 = vector.broadcast %160 : vector<16x1xf32> to vector<16x32xf32>
    %162 = arith.mulf %157, %161 : vector<16x32xf32>
    %163 = vector.broadcast %140 : vector<1x32xf32> to vector<16x32xf32>
    %164 = arith.mulf %162, %163 : vector<16x32xf32>
    %165 = vector.broadcast %142 : vector<1x32xf32> to vector<16x32xf32>
    %166 = arith.addf %164, %165 : vector<16x32xf32>
    %c0_69 = arith.constant 0 : index
    %c0_70 = arith.constant 0 : index
    %167 = vector.load %arg24[%c0_69, %c0_70] : memref<16x32xf32, #tpu.memory_space<vmem>>, vector<16x32xf32>
    tpu.vector_store %arg24[%c0_69, %c0_70], %166 {strides = array<i32>} : memref<16x32xf32, #tpu.memory_space<vmem>>, vector<16x32xf32>,
    %c1_i32 = arith.constant 1 : i32
    %168 = arith.cmpi eq, %arg0, %c1_i32 : i32
    %169 = arith.extui %168 : i1 to i32
    %c0_i32_71 = arith.constant 0 : i32
    %170 = arith.cmpi ne, %169, %c0_i32_71 : i32
    scf.if %170 {
      %171 = vector.shape_cast %166 : vector<16x32xf32> to vector<2x8x32xf32>
      %172 = vector.extract_strided_slice %171 {offsets = [0, 0, 0], sizes = [2, 1, 32], strides = [1, 1, 1]} : vector<2x8x32xf32> to vector<2x1x32xf32>
      %173 = vector.shape_cast %172 : vector<2x1x32xf32> to vector<2x32xf32>
      %174 = arith.truncf %173 : vector<2x32xf32> to vector<2x32xbf16>
      %c0_72 = arith.constant 0 : index
      %c0_73 = arith.constant 0 : index
      %175 = vector.load %arg17[%c0_72, %c0_73] : memref<32x32xbf16, #tpu.memory_space<vmem>>, vector<32x32xbf16>
      %cst_74 = arith.constant dense<0.000000e+00> : vector<2x32xf32>
      %176 = tpu.matmul %174, %175, %cst_74 {dimension_numbers = #tpu.dot_dimension_numbers<[1], [0], [0], [1], [0, 0, 1, 1], [], []>} : vector<2x32xbf16>, vector<32x32xbf16>, vector<2x32xf32> -> vector<2x32xf32>
      %c0_75 = arith.constant 0 : index
      %c0_76 = arith.constant 0 : index
      %177 = vector.load %arg18[%c0_75, %c0_76] : memref<1x32xf32, #tpu.memory_space<vmem>>, vector<1x32xf32>
      %178 = vector.broadcast %177 : vector<1x32xf32> to vector<2x32xf32>
      %179 = arith.addf %176, %178 : vector<2x32xf32>
      %180 = math.tanh %179 : vector<2x32xf32>
      %181 = arith.truncf %180 : vector<2x32xf32> to vector<2x32xbf16>
      %c0_77 = arith.constant 0 : index
      %c0_78 = arith.constant 0 : index
      %182 = vector.load %arg19[%c0_77, %c0_78] : memref<32x16xbf16, #tpu.memory_space<vmem>>, vector<32x16xbf16>
      %cst_79 = arith.constant dense<0.000000e+00> : vector<2x16xf32>
      %183 = tpu.matmul %181, %182, %cst_79 {dimension_numbers = #tpu.dot_dimension_numbers<[1], [0], [0], [1], [0, 0, 1, 1], [], []>} : vector<2x32xbf16>, vector<32x16xbf16>, vector<2x16xf32> -> vector<2x16xf32>
      %c0_80 = arith.constant 0 : index
      %c0_81 = arith.constant 0 : index
      %184 = vector.load %arg20[%c0_80, %c0_81] : memref<1x16xf32, #tpu.memory_space<vmem>>, vector<1x16xf32>
      %185 = vector.broadcast %184 : vector<1x16xf32> to vector<2x16xf32>
      %186 = arith.addf %183, %185 : vector<2x16xf32>
      %187 = math.tanh %186 : vector<2x16xf32>
      %188 = arith.truncf %187 : vector<2x16xf32> to vector<2x16xbf16>
      %c0_82 = arith.constant 0 : index
      %c0_83 = arith.constant 0 : index
      %189 = vector.load %arg21[%c0_82, %c0_83] : memref<16x4xbf16, #tpu.memory_space<vmem>>, vector<16x4xbf16>
      %cst_84 = arith.constant dense<0.000000e+00> : vector<2x4xf32>
      %190 = tpu.matmul %188, %189, %cst_84 {dimension_numbers = #tpu.dot_dimension_numbers<[1], [0], [0], [1], [0, 0, 1, 1], [], []>} : vector<2x16xbf16>, vector<16x4xbf16>, vector<2x4xf32> -> vector<2x4xf32>
      %c0_85 = arith.constant 0 : index
      %c0_86 = arith.constant 0 : index
      %191 = vector.load %arg22[%c0_85, %c0_86] : memref<1x4xf32, #tpu.memory_space<vmem>>, vector<1x4xf32>
      %192 = vector.broadcast %191 : vector<1x4xf32> to vector<2x4xf32>
      %193 = arith.addf %190, %192 : vector<2x4xf32>
      %cst_87 = arith.constant dense<0xFF800000> : vector<2xf32>
      %194 = vector.multi_reduction <maximumf>, %193, %cst_87 [1] : vector<2x4xf32> to vector<2xf32>
      %195 = vector.shape_cast %194 : vector<2xf32> to vector<2x1xf32>
      %196 = vector.broadcast %195 : vector<2x1xf32> to vector<2x4xf32>
      %197 = arith.subf %193, %196 : vector<2x4xf32>
      %198 = math.exp %197 : vector<2x4xf32>
      %cst_88 = arith.constant dense<0.000000e+00> : vector<2xf32>
      %199 = vector.multi_reduction <add>, %198, %cst_88 [1] : vector<2x4xf32> to vector<2xf32>
      %200 = vector.shape_cast %199 : vector<2xf32> to vector<2x1xf32>
      %201 = math.log %200 : vector<2x1xf32>
      %202 = vector.broadcast %201 : vector<2x1xf32> to vector<2x4xf32>
      %203 = arith.subf %197, %202 : vector<2x4xf32>
      %c0_89 = arith.constant 0 : index
      %c0_90 = arith.constant 0 : index
      %204 = vector.load %arg23[%c0_89, %c0_90] : memref<2x4xf32, #tpu.memory_space<vmem>>, vector<2x4xf32>
      tpu.vector_store %arg23[%c0_89, %c0_90], %203 {strides = array<i32>} : memref<2x4xf32, #tpu.memory_space<vmem>>, vector<2x4xf32>,
    } else {
    }
    return
  }
  func.func @transform_0(%arg0: i32) -> (i32, i32) {
    %c0_i32 = arith.constant 0 : i32
    %c0_i32_0 = arith.constant 0 : i32
    %c0_i32_1 = arith.constant 0 : i32
    return %c0_i32, %c0_i32_0 : i32, i32
  }
  func.func @transform_1(%arg0: i32) -> (i32, i32) {
    %c0_i32 = arith.constant 0 : i32
    %c0_i32_0 = arith.constant 0 : i32
    %c0_i32_1 = arith.constant 0 : i32
    return %c0_i32, %c0_i32_0 : i32, i32
  }
  func.func @transform_2(%arg0: i32) -> (i32, i32) {
    %c0_i32 = arith.constant 0 : i32
    %c0_i32_0 = arith.constant 0 : i32
    %c0_i32_1 = arith.constant 0 : i32
    return %c0_i32, %c0_i32_0 : i32, i32
  }
  func.func @transform_3(%arg0: i32) -> (i32, i32) {
    %c0_i32 = arith.constant 0 : i32
    %c0_i32_0 = arith.constant 0 : i32
    %c0_i32_1 = arith.constant 0 : i32
    return %c0_i32, %c0_i32_0 : i32, i32
  }
  func.func @transform_4(%arg0: i32) -> (i32, i32, i32) {
    %c0_i32 = arith.constant 0 : i32
    %c0_i32_0 = arith.constant 0 : i32
    %c0_i32_1 = arith.constant 0 : i32
    return %arg0, %c0_i32, %c0_i32_0 : i32, i32, i32
  }
  func.func @transform_5(%arg0: i32) -> (i32, i32, i32) {
    %c0_i32 = arith.constant 0 : i32
    %c0_i32_0 = arith.constant 0 : i32
    %c0_i32_1 = arith.constant 0 : i32
    return %arg0, %c0_i32, %c0_i32_0 : i32, i32, i32
  }
  func.func @transform_6(%arg0: i32) -> (i32, i32, i32) {
    %c0_i32 = arith.constant 0 : i32
    %c0_i32_0 = arith.constant 0 : i32
    %c0_i32_1 = arith.constant 0 : i32
    return %arg0, %c0_i32, %c0_i32_0 : i32, i32, i32
  }
  func.func @transform_7(%arg0: i32) -> (i32, i32, i32) {
    %c0_i32 = arith.constant 0 : i32
    %c0_i32_0 = arith.constant 0 : i32
    %c0_i32_1 = arith.constant 0 : i32
    return %arg0, %c0_i32, %c0_i32_0 : i32, i32, i32
  }
  func.func @transform_8(%arg0: i32) -> (i32, i32, i32) {
    %c0_i32 = arith.constant 0 : i32
    %c0_i32_0 = arith.constant 0 : i32
    %c0_i32_1 = arith.constant 0 : i32
    return %arg0, %c0_i32, %c0_i32_0 : i32, i32, i32
  }
  func.func @transform_9(%arg0: i32) -> (i32, i32, i32) {
    %c0_i32 = arith.constant 0 : i32
    %c0_i32_0 = arith.constant 0 : i32
    %c0_i32_1 = arith.constant 0 : i32
    return %arg0, %c0_i32, %c0_i32_0 : i32, i32, i32
  }
  func.func @transform_10(%arg0: i32) -> (i32, i32, i32) {
    %c0_i32 = arith.constant 0 : i32
    %c0_i32_0 = arith.constant 0 : i32
    %c0_i32_1 = arith.constant 0 : i32
    return %arg0, %c0_i32, %c0_i32_0 : i32, i32, i32
  }
  func.func @transform_11(%arg0: i32) -> (i32, i32, i32) {
    %c0_i32 = arith.constant 0 : i32
    %c0_i32_0 = arith.constant 0 : i32
    %c0_i32_1 = arith.constant 0 : i32
    return %arg0, %c0_i32, %c0_i32_0 : i32, i32, i32
  }
  func.func @transform_12(%arg0: i32) -> (i32, i32, i32) {
    %c0_i32 = arith.constant 0 : i32
    %c0_i32_0 = arith.constant 0 : i32
    %c0_i32_1 = arith.constant 0 : i32
    return %arg0, %c0_i32, %c0_i32_0 : i32, i32, i32
  }
  func.func @transform_13(%arg0: i32) -> (i32, i32, i32) {
    %c0_i32 = arith.constant 0 : i32
    %c0_i32_0 = arith.constant 0 : i32
    %c0_i32_1 = arith.constant 0 : i32
    return %arg0, %c0_i32, %c0_i32_0 : i32, i32, i32
  }
  func.func @transform_14(%arg0: i32) -> (i32, i32, i32) {
    %c0_i32 = arith.constant 0 : i32
    %c0_i32_0 = arith.constant 0 : i32
    %c0_i32_1 = arith.constant 0 : i32
    return %arg0, %c0_i32, %c0_i32_0 : i32, i32, i32
  }
  func.func @transform_15(%arg0: i32) -> (i32, i32, i32) {
    %c0_i32 = arith.constant 0 : i32
    %c0_i32_0 = arith.constant 0 : i32
    %c0_i32_1 = arith.constant 0 : i32
    return %arg0, %c0_i32, %c0_i32_0 : i32, i32, i32
  }
  func.func @transform_16(%arg0: i32) -> (i32, i32) {
    %c0_i32 = arith.constant 0 : i32
    %c0_i32_0 = arith.constant 0 : i32
    %c0_i32_1 = arith.constant 0 : i32
    return %c0_i32, %c0_i32_0 : i32, i32
  }
  func.func @transform_17(%arg0: i32) -> (i32, i32) {
    %c0_i32 = arith.constant 0 : i32
    %c0_i32_0 = arith.constant 0 : i32
    %c0_i32_1 = arith.constant 0 : i32
    return %c0_i32, %c0_i32_0 : i32, i32
  }
  func.func @transform_18(%arg0: i32) -> (i32, i32) {
    %c0_i32 = arith.constant 0 : i32
    %c0_i32_0 = arith.constant 0 : i32
    %c0_i32_1 = arith.constant 0 : i32
    return %c0_i32, %c0_i32_0 : i32, i32
  }
  func.func @transform_19(%arg0: i32) -> (i32, i32) {
    %c0_i32 = arith.constant 0 : i32
    %c0_i32_0 = arith.constant 0 : i32
    %c0_i32_1 = arith.constant 0 : i32
    return %c0_i32, %c0_i32_0 : i32, i32
  }
  func.func @transform_20(%arg0: i32) -> (i32, i32) {
    %c0_i32 = arith.constant 0 : i32
    %c0_i32_0 = arith.constant 0 : i32
    %c0_i32_1 = arith.constant 0 : i32
    return %c0_i32, %c0_i32_0 : i32, i32
  }
  func.func @transform_21(%arg0: i32) -> (i32, i32) {
    %c0_i32 = arith.constant 0 : i32
    %c0_i32_0 = arith.constant 0 : i32
    %c0_i32_1 = arith.constant 0 : i32
    return %c0_i32, %c0_i32_0 : i32, i32
  }
  func.func @transform_22(%arg0: i32) -> (i32, i32) {
    %c0_i32 = arith.constant 0 : i32
    %c0_i32_0 = arith.constant 0 : i32
    %c0_i32_1 = arith.constant 0 : i32
    return %c0_i32, %c0_i32_0 : i32, i32
  }
}

</mosaic_0001>

<llo_original>
// kernel: base_bert_forward.1
$region0: #{base_bert_forward.1}
  #allocation0 [shape = 'u32[]', space=smem, size = 0x4, offset = 0x4, fixed_abs, tag = 'smem constant byte address 0x4 - core index']
  #allocation1 [shape = 'u32[144,128]{1,0:T(1,128)}', space=vmem, size = 0x12000, scoped, tag = 'internal scratch']
  #allocation2 [shape = 'f32[16,32]{1,0:T(8,128)}', space=vmem, size = 0x2000, scoped, tag = 'scratch operand']
  %s0 = inlined_call_operand.vmem [shape: f32[16,32], index: 0, kind: input, shape index: {}]
  %s1 = inlined_call_operand.vmem [shape: f32[2,8], index: 1, kind: input, shape index: {}]
  %s2 = inlined_call_operand.vmem [shape: f32[1,32], index: 2, kind: input, shape index: {}]
  %s3 = inlined_call_operand.vmem [shape: f32[1,32], index: 3, kind: input, shape index: {}]
  %s4 = inlined_call_operand.vmem [shape: bf16[2,32,96], index: 4, kind: input, shape index: {}]
  %s5 = inlined_call_operand.vmem [shape: f32[2,1,96], index: 5, kind: input, shape index: {}]
  %s6 = inlined_call_operand.vmem [shape: bf16[2,32,32], index: 6, kind: input, shape index: {}]
  %s7 = inlined_call_operand.vmem [shape: f32[2,1,32], index: 7, kind: input, shape index: {}]
  %s8 = inlined_call_operand.vmem [shape: f32[2,1,32], index: 8, kind: input, shape index: {}]
  %s9 = inlined_call_operand.vmem [shape: f32[2,1,32], index: 9, kind: input, shape index: {}]
  %s10 = inlined_call_operand.vmem [shape: bf16[2,32,64], index: 10, kind: input, shape index: {}]
  %s11 = inlined_call_operand.vmem [shape: f32[2,1,64], index: 11, kind: input, shape index: {}]
  %s12 = inlined_call_operand.vmem [shape: bf16[2,64,32], index: 12, kind: input, shape index: {}]
  %s13 = inlined_call_operand.vmem [shape: f32[2,1,32], index: 13, kind: input, shape index: {}]
  %s14 = inlined_call_operand.vmem [shape: f32[2,1,32], index: 14, kind: input, shape index: {}]
  %s15 = inlined_call_operand.vmem [shape: f32[2,1,32], index: 15, kind: input, shape index: {}]
  %s16 = inlined_call_operand.vmem [shape: bf16[32,32], index: 16, kind: input, shape index: {}]
  %s17 = inlined_call_operand.vmem [shape: f32[1,32], index: 17, kind: input, shape index: {}]
  %s18 = inlined_call_operand.vmem [shape: bf16[32,16], index: 18, kind: input, shape index: {}]
  %s19 = inlined_call_operand.vmem [shape: f32[1,16], index: 19, kind: input, shape index: {}]
  %s20 = inlined_call_operand.vmem [shape: bf16[16,4], index: 20, kind: input, shape index: {}]
  %s21 = inlined_call_operand.vmem [shape: f32[1,4], index: 21, kind: input, shape index: {}]
  %s22 = inlined_call_operand.hbm [shape: f32[2,4], index: 22, kind: output, shape index: {}]
  %s23 = sld [smem:[#allocation0]]
  $region129: #{base_bert_forward.1} parent=0
    _
  %s25 = ssub.s32 1, %s23
  %s26 = scalar_select 0, %s25, %s23
  $region1: #{base_bert_forward.1} parent=0
    #allocation3 [shape = 'u8[1024]{0}', space=vmem, size = 0x400, scoped, tag = 'output window, operand 0, single buffered']
    #allocation4 [shape = 's32[2]{0}', space=sflag, size = 0x8, scoped, tag = 'scoped memory for base_bert_forward.1']
    %27 = vsyncpa [#allocation4], 0
    loop: start=0, step=1, limit=4
    $region2: #{base_bert_forward.1} parent=1 // loop_pre_header
      _
    $region3: #{base_bert_forward.1} parent=1 // loop_header
      %s29 = sphi 0, %s33
      %p30 = scmp.ge.s32.totalorder %s29, 4
      %s37 = sphi 0, %s37
      %s39 = sphi 0, %s37
      %s40 = sphi 0, %s39
      %s54 = sphi 0, %s40
      %s58 = sphi 0, %s58
      %s60 = sphi 0, %s58
      %s61 = sphi 0, %s60
      %s75 = sphi 0, %s61
      %s79 = sphi 0, %s79
      %s81 = sphi 0, %s79
      %s82 = sphi 0, %s81
      %s96 = sphi 0, %s82
      %s100 = sphi 0, %s100
      %s102 = sphi 0, %s100
      %s103 = sphi 0, %s102
      %s117 = sphi 0, %s103
      %s123 = sphi 0, %s125
      %s126 = sphi 0, %s123
      %s127 = sphi 0, %s126
      %s143 = sphi 0, %s127
      %s149 = sphi 0, %s151
      %s152 = sphi 0, %s149
      %s153 = sphi 0, %s152
      %s169 = sphi 0, %s153
      %s175 = sphi 0, %s177
      %s178 = sphi 0, %s175
      %s179 = sphi 0, %s178
      %s195 = sphi 0, %s179
      %s201 = sphi 0, %s203
      %s204 = sphi 0, %s201
      %s205 = sphi 0, %s204
      %s221 = sphi 0, %s205
      %s227 = sphi 0, %s229
      %s230 = sphi 0, %s227
      %s231 = sphi 0, %s230
      %s247 = sphi 0, %s231
      %s253 = sphi 0, %s255
      %s256 = sphi 0, %s253
      %s257 = sphi 0, %s256
      %s273 = sphi 0, %s257
      %s279 = sphi 0, %s281
      %s282 = sphi 0, %s279
      %s283 = sphi 0, %s282
      %s299 = sphi 0, %s283
      %s305 = sphi 0, %s307
      %s308 = sphi 0, %s305
      %s309 = sphi 0, %s308
      %s325 = sphi 0, %s309
      %s331 = sphi 0, %s333
      %s334 = sphi 0, %s331
      %s335 = sphi 0, %s334
      %s351 = sphi 0, %s335
      %s357 = sphi 0, %s359
      %s360 = sphi 0, %s357
      %s361 = sphi 0, %s360
      %s377 = sphi 0, %s361
      %s383 = sphi 0, %s385
      %s386 = sphi 0, %s383
      %s387 = sphi 0, %s386
      %s403 = sphi 0, %s387
      %s409 = sphi 0, %s411
      %s412 = sphi 0, %s409
      %s413 = sphi 0, %s412
      %s429 = sphi 0, %s413
      %s433 = sphi 0, %s433
      %s435 = sphi 0, %s433
      %s436 = sphi 0, %s435
      %s450 = sphi 0, %s436
      %s454 = sphi 0, %s454
      %s456 = sphi 0, %s454
      %s457 = sphi 0, %s456
      %s471 = sphi 0, %s457
      %s475 = sphi 0, %s475
      %s477 = sphi 0, %s475
      %s478 = sphi 0, %s477
      %s492 = sphi 0, %s478
      %s496 = sphi 0, %s496
      %s498 = sphi 0, %s496
      %s499 = sphi 0, %s498
      %s513 = sphi 0, %s499
      %s517 = sphi 0, %s517
      %s519 = sphi 0, %s517
      %s520 = sphi 0, %s519
      %s534 = sphi 0, %s520
      %s538 = sphi 0, %s538
      %s540 = sphi 0, %s538
      %s541 = sphi 0, %s540
      %s555 = sphi 0, %s541
      %s559 = sphi 0, %s559
      %s561 = sphi 0, %s559
      %s562 = sphi 0, %s561
      %s576 = sphi 0, %s562
    $region4: #{base_bert_forward.1} parent=1 // loop_header_branch
      %32 = sbr.rel (%p30) target = $region8
    $region5: #{base_bert_forward.1} parent=1 // loop_body
      %s34 = ssub.s32 %s29, 1
      %s35 = ssub.s32 %s29, 2
      %s36 = sadd.s32 %s29, 1
      %s38 = sadd.s32 %s37, 1
      %p41 = scmp.eq.s32.totalorder %s29, 1
      %p42 = scmp.ne.s32.totalorder %s37, %s39
      %p43 = scmp.eq.s32.totalorder %s29, 0
      %p44 = por %p42, %p43
      %p45 = scmp.ne.s32.totalorder %s37, %s39
      %p46 = scmp.eq.s32.totalorder %s34, 1
      %p47 = por %p45, %p46
      %p48 = scmp.ne.s32.totalorder %s39, %s40
      %p49 = scmp.eq.s32.totalorder %s34, 0
      %p50 = por %p48, %p49
      %p51 = scmp.ne.s32.totalorder %s39, %s40
      %p52 = scmp.eq.s32.totalorder %s35, 1
      %p53 = por %p51, %p52
      %p55 = scmp.ne.s32.totalorder %s40, %s54
      %p56 = scmp.eq.s32.totalorder %s35, 0
      %p57 = por %p55, %p56
      %s59 = sadd.s32 %s58, 1
      %p62 = scmp.eq.s32.totalorder %s29, 1
      %p63 = scmp.ne.s32.totalorder %s58, %s60
      %p64 = scmp.eq.s32.totalorder %s29, 0
      %p65 = por %p63, %p64
      %p66 = scmp.ne.s32.totalorder %s58, %s60
      %p67 = scmp.eq.s32.totalorder %s34, 1
      %p68 = por %p66, %p67
      %p69 = scmp.ne.s32.totalorder %s60, %s61
      %p70 = scmp.eq.s32.totalorder %s34, 0
      %p71 = por %p69, %p70
      %p72 = scmp.ne.s32.totalorder %s60, %s61
      %p73 = scmp.eq.s32.totalorder %s35, 1
      %p74 = por %p72, %p73
      %p76 = scmp.ne.s32.totalorder %s61, %s75
      %p77 = scmp.eq.s32.totalorder %s35, 0
      %p78 = por %p76, %p77
      %s80 = sadd.s32 %s79, 1
      %p83 = scmp.eq.s32.totalorder %s29, 1
      %p84 = scmp.ne.s32.totalorder %s79, %s81
      %p85 = scmp.eq.s32.totalorder %s29, 0
      %p86 = por %p84, %p85
      %p87 = scmp.ne.s32.totalorder %s79, %s81
      %p88 = scmp.eq.s32.totalorder %s34, 1
      %p89 = por %p87, %p88
      %p90 = scmp.ne.s32.totalorder %s81, %s82
      %p91 = scmp.eq.s32.totalorder %s34, 0
      %p92 = por %p90, %p91
      %p93 = scmp.ne.s32.totalorder %s81, %s82
      %p94 = scmp.eq.s32.totalorder %s35, 1
      %p95 = por %p93, %p94
      %p97 = scmp.ne.s32.totalorder %s82, %s96
      %p98 = scmp.eq.s32.totalorder %s35, 0
      %p99 = por %p97, %p98
      %s101 = sadd.s32 %s100, 1
      %p104 = scmp.eq.s32.totalorder %s29, 1
      %p105 = scmp.ne.s32.totalorder %s100, %s102
      %p106 = scmp.eq.s32.totalorder %s29, 0
      %p107 = por %p105, %p106
      %p108 = scmp.ne.s32.totalorder %s100, %s102
      %p109 = scmp.eq.s32.totalorder %s34, 1
      %p110 = por %p108, %p109
      %p111 = scmp.ne.s32.totalorder %s102, %s103
      %p112 = scmp.eq.s32.totalorder %s34, 0
      %p113 = por %p111, %p112
      %p114 = scmp.ne.s32.totalorder %s102, %s103
      %p115 = scmp.eq.s32.totalorder %s35, 1
      %p116 = por %p114, %p115
      %p118 = scmp.ne.s32.totalorder %s103, %s117
      %p119 = scmp.eq.s32.totalorder %s35, 0
      %p120 = por %p118, %p119
      %s121 = ssub.s32 %s29, %s36
      %p122 = scmp.eq.s32.totalorder %s121, 0
      %s124 = sadd.s32 %s123, 1
      %s125 = scalar_select %p122, %s123, %s124
      %p128 = pneg %p122
      %p129 = scmp.eq.s32.totalorder %s29, 1
      %p130 = por %p128, %p129
      %p131 = scmp.ne.s32.totalorder %s123, %s126
      %p132 = scmp.eq.s32.totalorder %s29, 0
      %p133 = por %p131, %p132
      %p134 = scmp.ne.s32.totalorder %s123, %s126
      %p135 = scmp.eq.s32.totalorder %s34, 1
      %p136 = por %p134, %p135
      %p137 = scmp.ne.s32.totalorder %s126, %s127
      %p138 = scmp.eq.s32.totalorder %s34, 0
      %p139 = por %p137, %p138
      %p140 = scmp.ne.s32.totalorder %s126, %s127
      %p141 = scmp.eq.s32.totalorder %s35, 1
      %p142 = por %p140, %p141
      %p144 = scmp.ne.s32.totalorder %s127, %s143
      %p145 = scmp.eq.s32.totalorder %s35, 0
      %p146 = por %p144, %p145
      %s147 = ssub.s32 %s29, %s36
      %p148 = scmp.eq.s32.totalorder %s147, 0
      %s150 = sadd.s32 %s149, 1
      %s151 = scalar_select %p148, %s149, %s150
      %p154 = pneg %p148
      %p155 = scmp.eq.s32.totalorder %s29, 1
      %p156 = por %p154, %p155
      %p157 = scmp.ne.s32.totalorder %s149, %s152
      %p158 = scmp.eq.s32.totalorder %s29, 0
      %p159 = por %p157, %p158
      %p160 = scmp.ne.s32.totalorder %s149, %s152
      %p161 = scmp.eq.s32.totalorder %s34, 1
      %p162 = por %p160, %p161
      %p163 = scmp.ne.s32.totalorder %s152, %s153
      %p164 = scmp.eq.s32.totalorder %s34, 0
      %p165 = por %p163, %p164
      %p166 = scmp.ne.s32.totalorder %s152, %s153
      %p167 = scmp.eq.s32.totalorder %s35, 1
      %p168 = por %p166, %p167
      %p170 = scmp.ne.s32.totalorder %s153, %s169
      %p171 = scmp.eq.s32.totalorder %s35, 0
      %p172 = por %p170, %p171
      %s173 = ssub.s32 %s29, %s36
      %p174 = scmp.eq.s32.totalorder %s173, 0
      %s176 = sadd.s32 %s175, 1
      %s177 = scalar_select %p174, %s175, %s176
      %p180 = pneg %p174
      %p181 = scmp.eq.s32.totalorder %s29, 1
      %p182 = por %p180, %p181
      %p183 = scmp.ne.s32.totalorder %s175, %s178
      %p184 = scmp.eq.s32.totalorder %s29, 0
      %p185 = por %p183, %p184
      %p186 = scmp.ne.s32.totalorder %s175, %s178
      %p187 = scmp.eq.s32.totalorder %s34, 1
      %p188 = por %p186, %p187
      %p189 = scmp.ne.s32.totalorder %s178, %s179
      %p190 = scmp.eq.s32.totalorder %s34, 0
      %p191 = por %p189, %p190
      %p192 = scmp.ne.s32.totalorder %s178, %s179
      %p193 = scmp.eq.s32.totalorder %s35, 1
      %p194 = por %p192, %p193
      %p196 = scmp.ne.s32.totalorder %s179, %s195
      %p197 = scmp.eq.s32.totalorder %s35, 0
      %p198 = por %p196, %p197
      %s199 = ssub.s32 %s29, %s36
      %p200 = scmp.eq.s32.totalorder %s199, 0
      %s202 = sadd.s32 %s201, 1
      %s203 = scalar_select %p200, %s201, %s202
      %p206 = pneg %p200
      %p207 = scmp.eq.s32.totalorder %s29, 1
      %p208 = por %p206, %p207
      %p209 = scmp.ne.s32.totalorder %s201, %s204
      %p210 = scmp.eq.s32.totalorder %s29, 0
      %p211 = por %p209, %p210
      %p212 = scmp.ne.s32.totalorder %s201, %s204
      %p213 = scmp.eq.s32.totalorder %s34, 1
      %p214 = por %p212, %p213
      %p215 = scmp.ne.s32.totalorder %s204, %s205
      %p216 = scmp.eq.s32.totalorder %s34, 0
      %p217 = por %p215, %p216
      %p218 = scmp.ne.s32.totalorder %s204, %s205
      %p219 = scmp.eq.s32.totalorder %s35, 1
      %p220 = por %p218, %p219
      %p222 = scmp.ne.s32.totalorder %s205, %s221
      %p223 = scmp.eq.s32.totalorder %s35, 0
      %p224 = por %p222, %p223
      %s225 = ssub.s32 %s29, %s36
      %p226 = scmp.eq.s32.totalorder %s225, 0
      %s228 = sadd.s32 %s227, 1
      %s229 = scalar_select %p226, %s227, %s228
      %p232 = pneg %p226
      %p233 = scmp.eq.s32.totalorder %s29, 1
      %p234 = por %p232, %p233
      %p235 = scmp.ne.s32.totalorder %s227, %s230
      %p236 = scmp.eq.s32.totalorder %s29, 0
      %p237 = por %p235, %p236
      %p238 = scmp.ne.s32.totalorder %s227, %s230
      %p239 = scmp.eq.s32.totalorder %s34, 1
      %p240 = por %p238, %p239
      %p241 = scmp.ne.s32.totalorder %s230, %s231
      %p242 = scmp.eq.s32.totalorder %s34, 0
      %p243 = por %p241, %p242
      %p244 = scmp.ne.s32.totalorder %s230, %s231
      %p245 = scmp.eq.s32.totalorder %s35, 1
      %p246 = por %p244, %p245
      %p248 = scmp.ne.s32.totalorder %s231, %s247
      %p249 = scmp.eq.s32.totalorder %s35, 0
      %p250 = por %p248, %p249
      %s251 = ssub.s32 %s29, %s36
      %p252 = scmp.eq.s32.totalorder %s251, 0
      %s254 = sadd.s32 %s253, 1
      %s255 = scalar_select %p252, %s253, %s254
      %p258 = pneg %p252
      %p259 = scmp.eq.s32.totalorder %s29, 1
      %p260 = por %p258, %p259
      %p261 = scmp.ne.s32.totalorder %s253, %s256
      %p262 = scmp.eq.s32.totalorder %s29, 0
      %p263 = por %p261, %p262
      %p264 = scmp.ne.s32.totalorder %s253, %s256
      %p265 = scmp.eq.s32.totalorder %s34, 1
      %p266 = por %p264, %p265
      %p267 = scmp.ne.s32.totalorder %s256, %s257
      %p268 = scmp.eq.s32.totalorder %s34, 0
      %p269 = por %p267, %p268
      %p270 = scmp.ne.s32.totalorder %s256, %s257
      %p271 = scmp.eq.s32.totalorder %s35, 1
      %p272 = por %p270, %p271
      %p274 = scmp.ne.s32.totalorder %s257, %s273
      %p275 = scmp.eq.s32.totalorder %s35, 0
      %p276 = por %p274, %p275
      %s277 = ssub.s32 %s29, %s36
      %p278 = scmp.eq.s32.totalorder %s277, 0
      %s280 = sadd.s32 %s279, 1
      %s281 = scalar_select %p278, %s279, %s280
      %p284 = pneg %p278
      %p285 = scmp.eq.s32.totalorder %s29, 1
      %p286 = por %p284, %p285
      %p287 = scmp.ne.s32.totalorder %s279, %s282
      %p288 = scmp.eq.s32.totalorder %s29, 0
      %p289 = por %p287, %p288
      %p290 = scmp.ne.s32.totalorder %s279, %s282
      %p291 = scmp.eq.s32.totalorder %s34, 1
      %p292 = por %p290, %p291
      %p293 = scmp.ne.s32.totalorder %s282, %s283
      %p294 = scmp.eq.s32.totalorder %s34, 0
      %p295 = por %p293, %p294
      %p296 = scmp.ne.s32.totalorder %s282, %s283
      %p297 = scmp.eq.s32.totalorder %s35, 1
      %p298 = por %p296, %p297
      %p300 = scmp.ne.s32.totalorder %s283, %s299
      %p301 = scmp.eq.s32.totalorder %s35, 0
      %p302 = por %p300, %p301
      %s303 = ssub.s32 %s29, %s36
      %p304 = scmp.eq.s32.totalorder %s303, 0
      %s306 = sadd.s32 %s305, 1
      %s307 = scalar_select %p304, %s305, %s306
      %p310 = pneg %p304
      %p311 = scmp.eq.s32.totalorder %s29, 1
      %p312 = por %p310, %p311
      %p313 = scmp.ne.s32.totalorder %s305, %s308
      %p314 = scmp.eq.s32.totalorder %s29, 0
      %p315 = por %p313, %p314
      %p316 = scmp.ne.s32.totalorder %s305, %s308
      %p317 = scmp.eq.s32.totalorder %s34, 1
      %p318 = por %p316, %p317
      %p319 = scmp.ne.s32.totalorder %s308, %s309
      %p320 = scmp.eq.s32.totalorder %s34, 0
      %p321 = por %p319, %p320
      %p322 = scmp.ne.s32.totalorder %s308, %s309
      %p323 = scmp.eq.s32.totalorder %s35, 1
      %p324 = por %p322, %p323
      %p326 = scmp.ne.s32.totalorder %s309, %s325
      %p327 = scmp.eq.s32.totalorder %s35, 0
      %p328 = por %p326, %p327
      %s329 = ssub.s32 %s29, %s36
      %p330 = scmp.eq.s32.totalorder %s329, 0
      %s332 = sadd.s32 %s331, 1
      %s333 = scalar_select %p330, %s331, %s332
      %p336 = pneg %p330
      %p337 = scmp.eq.s32.totalorder %s29, 1
      %p338 = por %p336, %p337
      %p339 = scmp.ne.s32.totalorder %s331, %s334
      %p340 = scmp.eq.s32.totalorder %s29, 0
      %p341 = por %p339, %p340
      %p342 = scmp.ne.s32.totalorder %s331, %s334
      %p343 = scmp.eq.s32.totalorder %s34, 1
      %p344 = por %p342, %p343
      %p345 = scmp.ne.s32.totalorder %s334, %s335
      %p346 = scmp.eq.s32.totalorder %s34, 0
      %p347 = por %p345, %p346
      %p348 = scmp.ne.s32.totalorder %s334, %s335
      %p349 = scmp.eq.s32.totalorder %s35, 1
      %p350 = por %p348, %p349
      %p352 = scmp.ne.s32.totalorder %s335, %s351
      %p353 = scmp.eq.s32.totalorder %s35, 0
      %p354 = por %p352, %p353
      %s355 = ssub.s32 %s29, %s36
      %p356 = scmp.eq.s32.totalorder %s355, 0
      %s358 = sadd.s32 %s357, 1
      %s359 = scalar_select %p356, %s357, %s358
      %p362 = pneg %p356
      %p363 = scmp.eq.s32.totalorder %s29, 1
      %p364 = por %p362, %p363
      %p365 = scmp.ne.s32.totalorder %s357, %s360
      %p366 = scmp.eq.s32.totalorder %s29, 0
      %p367 = por %p365, %p366
      %p368 = scmp.ne.s32.totalorder %s357, %s360
      %p369 = scmp.eq.s32.totalorder %s34, 1
      %p370 = por %p368, %p369
      %p371 = scmp.ne.s32.totalorder %s360, %s361
      %p372 = scmp.eq.s32.totalorder %s34, 0
      %p373 = por %p371, %p372
      %p374 = scmp.ne.s32.totalorder %s360, %s361
      %p375 = scmp.eq.s32.totalorder %s35, 1
      %p376 = por %p374, %p375
      %p378 = scmp.ne.s32.totalorder %s361, %s377
      %p379 = scmp.eq.s32.totalorder %s35, 0
      %p380 = por %p378, %p379
      %s381 = ssub.s32 %s29, %s36
      %p382 = scmp.eq.s32.totalorder %s381, 0
      %s384 = sadd.s32 %s383, 1
      %s385 = scalar_select %p382, %s383, %s384
      %p388 = pneg %p382
      %p389 = scmp.eq.s32.totalorder %s29, 1
      %p390 = por %p388, %p389
      %p391 = scmp.ne.s32.totalorder %s383, %s386
      %p392 = scmp.eq.s32.totalorder %s29, 0
      %p393 = por %p391, %p392
      %p394 = scmp.ne.s32.totalorder %s383, %s386
      %p395 = scmp.eq.s32.totalorder %s34, 1
      %p396 = por %p394, %p395
      %p397 = scmp.ne.s32.totalorder %s386, %s387
      %p398 = scmp.eq.s32.totalorder %s34, 0
      %p399 = por %p397, %p398
      %p400 = scmp.ne.s32.totalorder %s386, %s387
      %p401 = scmp.eq.s32.totalorder %s35, 1
      %p402 = por %p400, %p401
      %p404 = scmp.ne.s32.totalorder %s387, %s403
      %p405 = scmp.eq.s32.totalorder %s35, 0
      %p406 = por %p404, %p405
      %s407 = ssub.s32 %s29, %s36
      %p408 = scmp.eq.s32.totalorder %s407, 0
      %s410 = sadd.s32 %s409, 1
      %s411 = scalar_select %p408, %s409, %s410
      %p414 = pneg %p408
      %p415 = scmp.eq.s32.totalorder %s29, 1
      %p416 = por %p414, %p415
      %p417 = scmp.ne.s32.totalorder %s409, %s412
      %p418 = scmp.eq.s32.totalorder %s29, 0
      %p419 = por %p417, %p418
      %p420 = scmp.ne.s32.totalorder %s409, %s412
      %p421 = scmp.eq.s32.totalorder %s34, 1
      %p422 = por %p420, %p421
      %p423 = scmp.ne.s32.totalorder %s412, %s413
      %p424 = scmp.eq.s32.totalorder %s34, 0
      %p425 = por %p423, %p424
      %p426 = scmp.ne.s32.totalorder %s412, %s413
      %p427 = scmp.eq.s32.totalorder %s35, 1
      %p428 = por %p426, %p427
      %p430 = scmp.ne.s32.totalorder %s413, %s429
      %p431 = scmp.eq.s32.totalorder %s35, 0
      %p432 = por %p430, %p431
      %s434 = sadd.s32 %s433, 1
      %p437 = scmp.eq.s32.totalorder %s29, 1
      %p438 = scmp.ne.s32.totalorder %s433, %s435
      %p439 = scmp.eq.s32.totalorder %s29, 0
      %p440 = por %p438, %p439
      %p441 = scmp.ne.s32.totalorder %s433, %s435
      %p442 = scmp.eq.s32.totalorder %s34, 1
      %p443 = por %p441, %p442
      %p444 = scmp.ne.s32.totalorder %s435, %s436
      %p445 = scmp.eq.s32.totalorder %s34, 0
      %p446 = por %p444, %p445
      %p447 = scmp.ne.s32.totalorder %s435, %s436
      %p448 = scmp.eq.s32.totalorder %s35, 1
      %p449 = por %p447, %p448
      %p451 = scmp.ne.s32.totalorder %s436, %s450
      %p452 = scmp.eq.s32.totalorder %s35, 0
      %p453 = por %p451, %p452
      %s455 = sadd.s32 %s454, 1
      %p458 = scmp.eq.s32.totalorder %s29, 1
      %p459 = scmp.ne.s32.totalorder %s454, %s456
      %p460 = scmp.eq.s32.totalorder %s29, 0
      %p461 = por %p459, %p460
      %p462 = scmp.ne.s32.totalorder %s454, %s456
      %p463 = scmp.eq.s32.totalorder %s34, 1
      %p464 = por %p462, %p463
      %p465 = scmp.ne.s32.totalorder %s456, %s457
      %p466 = scmp.eq.s32.totalorder %s34, 0
      %p467 = por %p465, %p466
      %p468 = scmp.ne.s32.totalorder %s456, %s457
      %p469 = scmp.eq.s32.totalorder %s35, 1
      %p470 = por %p468, %p469
      %p472 = scmp.ne.s32.totalorder %s457, %s471
      %p473 = scmp.eq.s32.totalorder %s35, 0
      %p474 = por %p472, %p473
      %s476 = sadd.s32 %s475, 1
      %p479 = scmp.eq.s32.totalorder %s29, 1
      %p480 = scmp.ne.s32.totalorder %s475, %s477
      %p481 = scmp.eq.s32.totalorder %s29, 0
      %p482 = por %p480, %p481
      %p483 = scmp.ne.s32.totalorder %s475, %s477
      %p484 = scmp.eq.s32.totalorder %s34, 1
      %p485 = por %p483, %p484
      %p486 = scmp.ne.s32.totalorder %s477, %s478
      %p487 = scmp.eq.s32.totalorder %s34, 0
      %p488 = por %p486, %p487
      %p489 = scmp.ne.s32.totalorder %s477, %s478
      %p490 = scmp.eq.s32.totalorder %s35, 1
      %p491 = por %p489, %p490
      %p493 = scmp.ne.s32.totalorder %s478, %s492
      %p494 = scmp.eq.s32.totalorder %s35, 0
      %p495 = por %p493, %p494
      %s497 = sadd.s32 %s496, 1
      %p500 = scmp.eq.s32.totalorder %s29, 1
      %p501 = scmp.ne.s32.totalorder %s496, %s498
      %p502 = scmp.eq.s32.totalorder %s29, 0
      %p503 = por %p501, %p502
      %p504 = scmp.ne.s32.totalorder %s496, %s498
      %p505 = scmp.eq.s32.totalorder %s34, 1
      %p506 = por %p504, %p505
      %p507 = scmp.ne.s32.totalorder %s498, %s499
      %p508 = scmp.eq.s32.totalorder %s34, 0
      %p509 = por %p507, %p508
      %p510 = scmp.ne.s32.totalorder %s498, %s499
      %p511 = scmp.eq.s32.totalorder %s35, 1
      %p512 = por %p510, %p511
      %p514 = scmp.ne.s32.totalorder %s499, %s513
      %p515 = scmp.eq.s32.totalorder %s35, 0
      %p516 = por %p514, %p515
      %s518 = sadd.s32 %s517, 1
      %p521 = scmp.eq.s32.totalorder %s29, 1
      %p522 = scmp.ne.s32.totalorder %s517, %s519
      %p523 = scmp.eq.s32.totalorder %s29, 0
      %p524 = por %p522, %p523
      %p525 = scmp.ne.s32.totalorder %s517, %s519
      %p526 = scmp.eq.s32.totalorder %s34, 1
      %p527 = por %p525, %p526
      %p528 = scmp.ne.s32.totalorder %s519, %s520
      %p529 = scmp.eq.s32.totalorder %s34, 0
      %p530 = por %p528, %p529
      %p531 = scmp.ne.s32.totalorder %s519, %s520
      %p532 = scmp.eq.s32.totalorder %s35, 1
      %p533 = por %p531, %p532
      %p535 = scmp.ne.s32.totalorder %s520, %s534
      %p536 = scmp.eq.s32.totalorder %s35, 0
      %p537 = por %p535, %p536
      %s539 = sadd.s32 %s538, 1
      %p542 = scmp.eq.s32.totalorder %s29, 1
      %p543 = scmp.ne.s32.totalorder %s538, %s540
      %p544 = scmp.eq.s32.totalorder %s29, 0
      %p545 = por %p543, %p544
      %p546 = scmp.ne.s32.totalorder %s538, %s540
      %p547 = scmp.eq.s32.totalorder %s34, 1
      %p548 = por %p546, %p547
      %p549 = scmp.ne.s32.totalorder %s540, %s541
      %p550 = scmp.eq.s32.totalorder %s34, 0
      %p551 = por %p549, %p550
      %p552 = scmp.ne.s32.totalorder %s540, %s541
      %p553 = scmp.eq.s32.totalorder %s35, 1
      %p554 = por %p552, %p553
      %p556 = scmp.ne.s32.totalorder %s541, %s555
      %p557 = scmp.eq.s32.totalorder %s35, 0
      %p558 = por %p556, %p557
      %s560 = sadd.s32 %s559, 1
      %p563 = scmp.eq.s32.totalorder %s29, 1
      %p564 = scmp.ne.s32.totalorder %s559, %s561
      %p565 = scmp.eq.s32.totalorder %s29, 0
      %p566 = por %p564, %p565
      %p567 = scmp.ne.s32.totalorder %s559, %s561
      %p568 = scmp.eq.s32.totalorder %s34, 1
      %p569 = por %p567, %p568
      %p570 = scmp.ne.s32.totalorder %s561, %s562
      %p571 = scmp.eq.s32.totalorder %s34, 0
      %p572 = por %p570, %p571
      %p573 = scmp.ne.s32.totalorder %s561, %s562
      %p574 = scmp.eq.s32.totalorder %s35, 1
      %p575 = por %p573, %p574
      %p577 = scmp.ne.s32.totalorder %s562, %s576
      %p578 = scmp.eq.s32.totalorder %s35, 0
      %p579 = por %p577, %p578
      %p580 = scmp.le.s32.totalorder 1, %s29
      %p581 = scmp.lt.s32.totalorder %s29, 3
      %p582 = pnand %p580, %p581
      %p583 = pneg %p582
      // Predicated region
      $region9: #{base_bert_forward.1} parent=5 // pred_check
        _
      $region10: #{base_bert_forward.1} parent=5 // pred_check_branch
        %585 = sbr.rel (%p582) target = $region12
      $region11: #{base_bert_forward.1} parent=5 // pred_region
        %s586 = ssub.s32 %s29, 1
        // Predicated region
        $region13: #{base_bert_forward.1} parent=11 // pred_check
          %p587 = pneg %p50
        $region14: #{base_bert_forward.1} parent=11 // pred_check_branch
          %589 = sbr.rel (%p587) target = $region16
        $region15: #{base_bert_forward.1} parent=11 // pred_region
          _
        $region16: #{base_bert_forward.1} parent=11 // pred_fallthru
          _
        // Predicated region
        $region17: #{base_bert_forward.1} parent=11 // pred_check
          %p590 = pneg %p71
        $region18: #{base_bert_forward.1} parent=11 // pred_check_branch
          %592 = sbr.rel (%p590) target = $region20
        $region19: #{base_bert_forward.1} parent=11 // pred_region
          _
        $region20: #{base_bert_forward.1} parent=11 // pred_fallthru
          _
        // Predicated region
        $region21: #{base_bert_forward.1} parent=11 // pred_check
          %p593 = pneg %p92
        $region22: #{base_bert_forward.1} parent=11 // pred_check_branch
          %595 = sbr.rel (%p593) target = $region24
        $region23: #{base_bert_forward.1} parent=11 // pred_region
          _
        $region24: #{base_bert_forward.1} parent=11 // pred_fallthru
          _
        // Predicated region
        $region25: #{base_bert_forward.1} parent=11 // pred_check
          %p596 = pneg %p113
        $region26: #{base_bert_forward.1} parent=11 // pred_check_branch
          %598 = sbr.rel (%p596) target = $region28
        $region27: #{base_bert_forward.1} parent=11 // pred_region
          _
        $region28: #{base_bert_forward.1} parent=11 // pred_fallthru
          _
        // Predicated region
        $region29: #{base_bert_forward.1} parent=11 // pred_check
          %p599 = pneg %p446
        $region30: #{base_bert_forward.1} parent=11 // pred_check_branch
          %601 = sbr.rel (%p599) target = $region32
        $region31: #{base_bert_forward.1} parent=11 // pred_region
          _
        $region32: #{base_bert_forward.1} parent=11 // pred_fallthru
          _
        // Predicated region
        $region33: #{base_bert_forward.1} parent=11 // pred_check
          %p602 = pneg %p467
        $region34: #{base_bert_forward.1} parent=11 // pred_check_branch
          %604 = sbr.rel (%p602) target = $region36
        $region35: #{base_bert_forward.1} parent=11 // pred_region
          _
        $region36: #{base_bert_forward.1} parent=11 // pred_fallthru
          _
        // Predicated region
        $region37: #{base_bert_forward.1} parent=11 // pred_check
          %p605 = pneg %p488
        $region38: #{base_bert_forward.1} parent=11 // pred_check_branch
          %607 = sbr.rel (%p605) target = $region40
        $region39: #{base_bert_forward.1} parent=11 // pred_region
          _
        $region40: #{base_bert_forward.1} parent=11 // pred_fallthru
          _
        // Predicated region
        $region41: #{base_bert_forward.1} parent=11 // pred_check
          %p608 = pneg %p509
        $region42: #{base_bert_forward.1} parent=11 // pred_check_branch
          %610 = sbr.rel (%p608) target = $region44
        $region43: #{base_bert_forward.1} parent=11 // pred_region
          _
        $region44: #{base_bert_forward.1} parent=11 // pred_fallthru
          _
        // Predicated region
        $region45: #{base_bert_forward.1} parent=11 // pred_check
          %p611 = pneg %p530
        $region46: #{base_bert_forward.1} parent=11 // pred_check_branch
          %613 = sbr.rel (%p611) target = $region48
        $region47: #{base_bert_forward.1} parent=11 // pred_region
          _
        $region48: #{base_bert_forward.1} parent=11 // pred_fallthru
          _
        // Predicated region
        $region49: #{base_bert_forward.1} parent=11 // pred_check
          %p614 = pneg %p551
        $region50: #{base_bert_forward.1} parent=11 // pred_check_branch
          %616 = sbr.rel (%p614) target = $region52
        $region51: #{base_bert_forward.1} parent=11 // pred_region
          _
        $region52: #{base_bert_forward.1} parent=11 // pred_fallthru
          _
      $region12: #{base_bert_forward.1} parent=5 // pred_fallthru
        _
      %p617 = scmp.lt.s32.totalorder %s29, 2
      // Predicated region
      $region53: #{base_bert_forward.1} parent=5 // pred_check
        %p618 = pneg %p617
      $region54: #{base_bert_forward.1} parent=5 // pred_check_branch
        %620 = sbr.rel (%p618) target = $region56
      $region55: #{base_bert_forward.1} parent=5 // pred_region
        // Predicated region
        $region57: #{base_bert_forward.1} parent=55 // pred_check
          %p621 = pneg %p133
        $region58: #{base_bert_forward.1} parent=55 // pred_check_branch
          %623 = sbr.rel (%p621) target = $region60
        $region59: #{base_bert_forward.1} parent=55 // pred_region
          %p624 = scmp.lt.s32.totalorder %s29, 1
          %s625 = scalar_select %p624, %s29, 1
          %s626 = smul.addr %s625, 4
          %s627 = smul.addr %s626, 4
          %s628 = scalar_lea.vmem %s4, %s627
        $region60: #{base_bert_forward.1} parent=55 // pred_fallthru
          _
        // Predicated region
        $region61: #{base_bert_forward.1} parent=55 // pred_check
          %p629 = pneg %p159
        $region62: #{base_bert_forward.1} parent=55 // pred_check_branch
          %631 = sbr.rel (%p629) target = $region64
        $region63: #{base_bert_forward.1} parent=55 // pred_region
          %p632 = scmp.lt.s32.totalorder %s29, 1
          %s633 = scalar_select %p632, %s29, 1
          %s634 = scalar_lea.vmem %s5, %s633
        $region64: #{base_bert_forward.1} parent=55 // pred_fallthru
          _
        // Predicated region
        $region65: #{base_bert_forward.1} parent=55 // pred_check
          %p635 = pneg %p185
        $region66: #{base_bert_forward.1} parent=55 // pred_check_branch
          %637 = sbr.rel (%p635) target = $region68
        $region67: #{base_bert_forward.1} parent=55 // pred_region
          %p638 = scmp.lt.s32.totalorder %s29, 1
          %s639 = scalar_select %p638, %s29, 1
          %s640 = smul.addr %s639, 4
          %s641 = smul.addr %s640, 4
          %s642 = scalar_lea.vmem %s6, %s641
        $region68: #{base_bert_forward.1} parent=55 // pred_fallthru
          _
        // Predicated region
        $region69: #{base_bert_forward.1} parent=55 // pred_check
          %p643 = pneg %p211
        $region70: #{base_bert_forward.1} parent=55 // pred_check_branch
          %645 = sbr.rel (%p643) target = $region72
        $region71: #{base_bert_forward.1} parent=55 // pred_region
          %p646 = scmp.lt.s32.totalorder %s29, 1
          %s647 = scalar_select %p646, %s29, 1
          %s648 = scalar_lea.vmem %s7, %s647
        $region72: #{base_bert_forward.1} parent=55 // pred_fallthru
          _
        // Predicated region
        $region73: #{base_bert_forward.1} parent=55 // pred_check
          %p649 = pneg %p237
        $region74: #{base_bert_forward.1} parent=55 // pred_check_branch
          %651 = sbr.rel (%p649) target = $region76
        $region75: #{base_bert_forward.1} parent=55 // pred_region
          %p652 = scmp.lt.s32.totalorder %s29, 1
          %s653 = scalar_select %p652, %s29, 1
          %s654 = scalar_lea.vmem %s8, %s653
        $region76: #{base_bert_forward.1} parent=55 // pred_fallthru
          _
        // Predicated region
        $region77: #{base_bert_forward.1} parent=55 // pred_check
          %p655 = pneg %p263
        $region78: #{base_bert_forward.1} parent=55 // pred_check_branch
          %657 = sbr.rel (%p655) target = $region80
        $region79: #{base_bert_forward.1} parent=55 // pred_region
          %p658 = scmp.lt.s32.totalorder %s29, 1
          %s659 = scalar_select %p658, %s29, 1
          %s660 = scalar_lea.vmem %s9, %s659
        $region80: #{base_bert_forward.1} parent=55 // pred_fallthru
          _
        // Predicated region
        $region81: #{base_bert_forward.1} parent=55 // pred_check
          %p661 = pneg %p289
        $region82: #{base_bert_forward.1} parent=55 // pred_check_branch
          %663 = sbr.rel (%p661) target = $region84
        $region83: #{base_bert_forward.1} parent=55 // pred_region
          %p664 = scmp.lt.s32.totalorder %s29, 1
          %s665 = scalar_select %p664, %s29, 1
          %s666 = smul.addr %s665, 4
          %s667 = smul.addr %s666, 4
          %s668 = scalar_lea.vmem %s10, %s667
        $region84: #{base_bert_forward.1} parent=55 // pred_fallthru
          _
        // Predicated region
        $region85: #{base_bert_forward.1} parent=55 // pred_check
          %p669 = pneg %p315
        $region86: #{base_bert_forward.1} parent=55 // pred_check_branch
          %671 = sbr.rel (%p669) target = $region88
        $region87: #{base_bert_forward.1} parent=55 // pred_region
          %p672 = scmp.lt.s32.totalorder %s29, 1
          %s673 = scalar_select %p672, %s29, 1
          %s674 = scalar_lea.vmem %s11, %s673
        $region88: #{base_bert_forward.1} parent=55 // pred_fallthru
          _
        // Predicated region
        $region89: #{base_bert_forward.1} parent=55 // pred_check
          %p675 = pneg %p341
        $region90: #{base_bert_forward.1} parent=55 // pred_check_branch
          %677 = sbr.rel (%p675) target = $region92
        $region91: #{base_bert_forward.1} parent=55 // pred_region
          %p678 = scmp.lt.s32.totalorder %s29, 1
          %s679 = scalar_select %p678, %s29, 1
          %s680 = smul.addr %s679, 8
          %s681 = smul.addr %s680, 4
          %s682 = scalar_lea.vmem %s12, %s681
        $region92: #{base_bert_forward.1} parent=55 // pred_fallthru
          _
        // Predicated region
        $region93: #{base_bert_forward.1} parent=55 // pred_check
          %p683 = pneg %p367
        $region94: #{base_bert_forward.1} parent=55 // pred_check_branch
          %685 = sbr.rel (%p683) target = $region96
        $region95: #{base_bert_forward.1} parent=55 // pred_region
          %p686 = scmp.lt.s32.totalorder %s29, 1
          %s687 = scalar_select %p686, %s29, 1
          %s688 = scalar_lea.vmem %s13, %s687
        $region96: #{base_bert_forward.1} parent=55 // pred_fallthru
          _
        // Predicated region
        $region97: #{base_bert_forward.1} parent=55 // pred_check
          %p689 = pneg %p393
        $region98: #{base_bert_forward.1} parent=55 // pred_check_branch
          %691 = sbr.rel (%p689) target = $region100
        $region99: #{base_bert_forward.1} parent=55 // pred_region
          %p692 = scmp.lt.s32.totalorder %s29, 1
          %s693 = scalar_select %p692, %s29, 1
          %s694 = scalar_lea.vmem %s14, %s693
        $region100: #{base_bert_forward.1} parent=55 // pred_fallthru
          _
        // Predicated region
        $region101: #{base_bert_forward.1} parent=55 // pred_check
          %p695 = pneg %p419
        $region102: #{base_bert_forward.1} parent=55 // pred_check_branch
          %697 = sbr.rel (%p695) target = $region104
        $region103: #{base_bert_forward.1} parent=55 // pred_region
          %p698 = scmp.lt.s32.totalorder %s29, 1
          %s699 = scalar_select %p698, %s29, 1
          %s700 = scalar_lea.vmem %s15, %s699
        $region104: #{base_bert_forward.1} parent=55 // pred_fallthru
          _
      $region56: #{base_bert_forward.1} parent=5 // pred_fallthru
        _
      %p701 = scmp.le.s32.totalorder 1, %s29
      %p702 = scmp.lt.s32.totalorder %s29, 3
      %p703 = pnand %p701, %p702
      %p704 = pneg %p703
      // Predicated region
      $region105: #{base_bert_forward.1} parent=5 // pred_check
        _
      $region106: #{base_bert_forward.1} parent=5 // pred_check_branch
        %706 = sbr.rel (%p703) target = $region108
      $region107: #{base_bert_forward.1} parent=5 // pred_region
        %s707 = ssub.s32 %s29, 1
        %p708 = pneg %p50
        %p709 = pneg %p47
        %p710 = pneg %p71
        %p711 = pneg %p68
        %p712 = pneg %p92
        %p713 = pneg %p89
        %p714 = pneg %p113
        %p715 = pneg %p110
        %p716 = scmp.lt.s32.totalorder %s34, 1
        %s717 = scalar_select %p716, %s34, 1
        %s718 = smul.addr %s717, 4
        %s719 = smul.addr %s718, 4
        %s720 = scalar_lea.vmem %s4, %s719
        %p721 = pneg %p139
        %p722 = pneg %p136
        %p723 = scmp.lt.s32.totalorder %s34, 1
        %s724 = scalar_select %p723, %s34, 1
        %s725 = scalar_lea.vmem %s5, %s724
        %p726 = pneg %p165
        %p727 = pneg %p162
        %p728 = scmp.lt.s32.totalorder %s34, 1
        %s729 = scalar_select %p728, %s34, 1
        %s730 = smul.addr %s729, 4
        %s731 = smul.addr %s730, 4
        %s732 = scalar_lea.vmem %s6, %s731
        %p733 = pneg %p191
        %p734 = pneg %p188
        %p735 = scmp.lt.s32.totalorder %s34, 1
        %s736 = scalar_select %p735, %s34, 1
        %s737 = scalar_lea.vmem %s7, %s736
        %p738 = pneg %p217
        %p739 = pneg %p214
        %p740 = scmp.lt.s32.totalorder %s34, 1
        %s741 = scalar_select %p740, %s34, 1
        %s742 = scalar_lea.vmem %s8, %s741
        %p743 = pneg %p243
        %p744 = pneg %p240
        %p745 = scmp.lt.s32.totalorder %s34, 1
        %s746 = scalar_select %p745, %s34, 1
        %s747 = scalar_lea.vmem %s9, %s746
        %p748 = pneg %p269
        %p749 = pneg %p266
        %p750 = scmp.lt.s32.totalorder %s34, 1
        %s751 = scalar_select %p750, %s34, 1
        %s752 = smul.addr %s751, 4
        %s753 = smul.addr %s752, 4
        %s754 = scalar_lea.vmem %s10, %s753
        %p755 = pneg %p295
        %p756 = pneg %p292
        %p757 = scmp.lt.s32.totalorder %s34, 1
        %s758 = scalar_select %p757, %s34, 1
        %s759 = scalar_lea.vmem %s11, %s758
        %p760 = pneg %p321
        %p761 = pneg %p318
        %p762 = scmp.lt.s32.totalorder %s34, 1
        %s763 = scalar_select %p762, %s34, 1
        %s764 = smul.addr %s763, 8
        %s765 = smul.addr %s764, 4
        %s766 = scalar_lea.vmem %s12, %s765
        %p767 = pneg %p347
        %p768 = pneg %p344
        %p769 = scmp.lt.s32.totalorder %s34, 1
        %s770 = scalar_select %p769, %s34, 1
        %s771 = scalar_lea.vmem %s13, %s770
        %p772 = pneg %p373
        %p773 = pneg %p370
        %p774 = scmp.lt.s32.totalorder %s34, 1
        %s775 = scalar_select %p774, %s34, 1
        %s776 = scalar_lea.vmem %s14, %s775
        %p777 = pneg %p399
        %p778 = pneg %p396
        %p779 = scmp.lt.s32.totalorder %s34, 1
        %s780 = scalar_select %p779, %s34, 1
        %s781 = scalar_lea.vmem %s15, %s780
        %p782 = pneg %p425
        %p783 = pneg %p422
        %p784 = pneg %p446
        %p785 = pneg %p443
        %p786 = pneg %p467
        %p787 = pneg %p464
        %p788 = pneg %p488
        %p789 = pneg %p485
        %p790 = pneg %p509
        %p791 = pneg %p506
        %p792 = pneg %p530
        %p793 = pneg %p527
        %p794 = pneg %p551
        %p795 = pneg %p548
        %p796 = pneg %p572
        %p797 = pneg %p569
        %p798 = scmp.lt.s32.totalorder %s34, 1
        %s799 = scalar_select %p798, %s34, 1
        %s800 = smul.addr %s799, 4
        %s801 = smul.addr %s800, 4
        %s802 = scalar_lea.vmem %s4, %s801
        %p803 = scmp.lt.s32.totalorder %s34, 1
        %s804 = scalar_select %p803, %s34, 1
        %s805 = scalar_lea.vmem %s5, %s804
        %p806 = scmp.lt.s32.totalorder %s34, 1
        %s807 = scalar_select %p806, %s34, 1
        %s808 = smul.addr %s807, 4
        %s809 = smul.addr %s808, 4
        %s810 = scalar_lea.vmem %s6, %s809
        %p811 = scmp.lt.s32.totalorder %s34, 1
        %s812 = scalar_select %p811, %s34, 1
        %s813 = scalar_lea.vmem %s7, %s812
        %p814 = scmp.lt.s32.totalorder %s34, 1
        %s815 = scalar_select %p814, %s34, 1
        %s816 = scalar_lea.vmem %s8, %s815
        %p817 = scmp.lt.s32.totalorder %s34, 1
        %s818 = scalar_select %p817, %s34, 1
        %s819 = scalar_lea.vmem %s9, %s818
        %p820 = scmp.lt.s32.totalorder %s34, 1
        %s821 = scalar_select %p820, %s34, 1
        %s822 = smul.addr %s821, 4
        %s823 = smul.addr %s822, 4
        %s824 = scalar_lea.vmem %s10, %s823
        %p825 = scmp.lt.s32.totalorder %s34, 1
        %s826 = scalar_select %p825, %s34, 1
        %s827 = scalar_lea.vmem %s11, %s826
        %p828 = scmp.lt.s32.totalorder %s34, 1
        %s829 = scalar_select %p828, %s34, 1
        %s830 = smul.addr %s829, 8
        %s831 = smul.addr %s830, 4
        %s832 = scalar_lea.vmem %s12, %s831
        %p833 = scmp.lt.s32.totalorder %s34, 1
        %s834 = scalar_select %p833, %s34, 1
        %s835 = scalar_lea.vmem %s13, %s834
        %p836 = scmp.lt.s32.totalorder %s34, 1
        %s837 = scalar_select %p836, %s34, 1
        %s838 = scalar_lea.vmem %s14, %s837
        %p839 = scmp.lt.s32.totalorder %s34, 1
        %s840 = scalar_select %p839, %s34, 1
        %s841 = scalar_lea.vmem %s15, %s840
        %p843 = scmp.eq.s32.totalorder %s34, 0
        // Predicated region
        $region109: #{base_bert_forward.1} parent=107 // pred_check
          %p844 = pneg %p843
        $region110: #{base_bert_forward.1} parent=107 // pred_check_branch
          %846 = sbr.rel (%p844) target = $region112
        $region111: #{base_bert_forward.1} parent=107 // pred_region
          %v847 = vld [vmem:[%s0] sm:$0xff]
          %v848 = vld [vmem:[%s0 + $0x8] sm:$0xff]
          %v849 = vld [vmem:[%s2] sm:$0x1]
          %v850 = vld [vmem:[%s3] sm:$0x1]
          %vm851 = vcmask 261120
          %v852 = vsel %vm851, %v847, 0.0
          %853 = vadd.xlane.f32.xlu0 %v852
          %v854 = vpop.xlane.xlu0 %853
          %v855 = vsel %vm851, %v848, 0.0
          %856 = vadd.xlane.f32.xlu0 %v855
          %v857 = vpop.xlane.xlu0 %856
          %v858 = vrcp.pop 32.0
          %v859 = vmul.f32 %v854, %v858
          %v860 = vmul.f32 %v857, %v858
          %v861 = vmul.f32 %v847, %v847
          %v862 = vmul.f32 %v848, %v848
          %v863 = vsel %vm851, %v861, 0.0
          %864 = vadd.xlane.f32.xlu0 %v863
          %v865 = vpop.xlane.xlu0 %864
          %v866 = vsel %vm851, %v862, 0.0
          %867 = vadd.xlane.f32.xlu0 %v866
          %v868 = vpop.xlane.xlu0 %867
          %v869 = vmul.f32 %v865, %v858
          %v870 = vmul.f32 %v868, %v858
          %v871 = vmul.f32 %v859, %v859
          %v872 = vmul.f32 %v860, %v860
          %v873 = vsub.f32 %v869, %v871
          %v874 = vsub.f32 %v870, %v872
          %v875 = vmax.f32 %v873, 0.0
          %v876 = vmax.f32 %v874, 0.0
          %v877 = vsub.f32 %v847, %v859
          %v878 = vsub.f32 %v848, %v860
          %v879 = vadd.f32 %v875, 1e-12
          %v880 = vadd.f32 %v876, 1e-12
          %v881 = vrsqrt.pop %v879
          %v882 = vrsqrt.pop %v880
          %v883 = vmul.f32 %v877, %v881
          %v884 = vmul.f32 %v878, %v882
          %v886 = vlaneseq
          %v887 = vshrl.u32 %v886, 7
          %v888 = vsub.s32 0, %v887
          %v889 = vrot.slane %v849, %v888
          %v891 = vmul.f32 %v883, %v889
          %v892 = vmul.f32 %v884, %v889
          %v894 = vlaneseq
          %v895 = vshrl.u32 %v894, 7
          %v896 = vsub.s32 0, %v895
          %v897 = vrot.slane %v850, %v896
          %v899 = vadd.f32 %v891, %v897
          %v900 = vadd.f32 %v892, %v897
          %901 = vst.msk [vmem:[#allocation2] sm:$0xff] %vm851, %v899
          %902 = vst.msk [vmem:[#allocation2 + $0x8] sm:$0xff] %vm851, %v900
        $region112: #{base_bert_forward.1} parent=107 // pred_fallthru
          _
        %v903 = vld [vmem:[#allocation2] sm:$0xff]
        %v904 = vld [vmem:[#allocation2 + $0x8] sm:$0xff]
        %v905 = vpack.c.bf16 %v904, %v903
        %v906 = vld [vmem:[%s802] sm:$0xf]
        %v907 = vld [vmem:[%s802 + $0x4] sm:$0xf]
        %v908 = vld [vmem:[%s802 + $0x8] sm:$0xf]
        %v909 = vld [vmem:[%s802 + $0xc] sm:$0xf]
        %v910 = vld [vmem:[%s805] sm:$0x1]
        %v912 = vlaneseq
        %v913 = vshrl.u32 %v912, 7
        %v914 = vsub.s32 0, %v913
        %v915 = vrot.slane %v910, %v914
        %v921 = vunpack.c.l.b16 %v906
        %v922 = vunpack.c.l.b16 %v907
        %v923 = vunpack.c.l.b16 %v908
        %v924 = vunpack.c.l.b16 %v909
        %v925 = vpack.c.b16 %v922, %v921
        %v926 = vpack.c.b16 %v924, %v923
        %vm929 = vcmask 261120
        %v931 = vsel %vm929, %v905, 0
        %933 = vmatprep.subr.bf16.mxu0 0
        %934 = vmatpush1.bf16.msra.mxu0 %v925
        %935 = vmatprep.subr.bf16.mxu0 0
        %936 = vmatpush1.bf16.msra.mxu0 %v926
        %937 = vmatprep.subr.bf16.mxu0 0
        %938 = vmatpush1.bf16.msra.mxu0 0
        %939 = vmatprep.subr.bf16.mxu0 0
        %940 = vmatpush1.bf16.msra.mxu0 0
        %941 = vmatprep.subr.bf16.mxu0 0
        %942 = vmatpush1.bf16.msra.mxu0 0
        %943 = vmatprep.subr.bf16.mxu0 0
        %944 = vmatpush1.bf16.msra.mxu0 0
        %945 = vmatprep.subr.bf16.mxu0 0
        %946 = vmatpush1.bf16.msra.mxu0 0
        %947 = vmatprep.subr.bf16.mxu0 0
        %948 = vmatpush1.bf16.msra.mxu0 0
        %949 = vmatprep.subr.bf16.mxu0 0
        %950 = vmatpush1.bf16.msra.mxu0 0
        %951 = vmatprep.subr.bf16.mxu0 0
        %952 = vmatpush1.bf16.msra.mxu0 0
        %953 = vmatprep.subr.bf16.mxu0 0
        %954 = vmatpush1.bf16.msra.mxu0 0
        %955 = vmatprep.subr.bf16.mxu0 0
        %956 = vmatpush1.bf16.msra.mxu0 0
        %957 = vmatprep.subr.bf16.mxu0 0
        %958 = vmatpush1.bf16.msra.mxu0 0
        %959 = vmatprep.subr.bf16.mxu0 0
        %960 = vmatpush1.bf16.msra.mxu0 0
        %961 = vmatprep.subr.bf16.mxu0 0
        %962 = vmatpush1.bf16.msra.mxu0 0
        %963 = vmatprep.subr.bf16.mxu0 0
        %964 = vmatpush1.bf16.msra.mxu0 0
        %965 = vmatprep.mubr.bf16.mxu0 0
        %966 = vmatmul.mubr.bf16.gmra.mrb[0].mxu0 %v931
        %v967 = vpop.f32.mrb[0].mxu0
        %v968 = vadd.f32 %v915, %v967
        %v969 = vpop.f32.mrb[0].mxu0
        %v970 = vpop.f32.mrb[0].mxu0
        %v971 = vadd.f32 %v915, %v970
        %v972 = vpop.f32.mrb[0].mxu0
        %973 = vdwg.mxu0
        %v974 = vld [vmem:[%s1] sm:$0x3]
        %v977 = vunpack.c.l.s4 1966171168
        %v978 = vunpack.c.0.s8 %v977
        %v979 = vlaneseq
        %v980 = vshrl.u32 %v979, 7
        %v981 = vsub.s32 %v978, %v980
        %v982 = vrot.slane %v974, %v981
        %v983 = vcombine.high %v982, %v982
        %v985 = vunpack.c.l.s4 1966171168
        %v986 = vunpack.c.0.s8 %v985
        %v987 = vlaneseq
        %v988 = vshrl.u32 %v987, 7
        %v989 = vsub.s32 %v986, %v988
        %v990 = vrot.slane %v982, %v989
        %v992 = vunpack.c.l.s4 1966171168
        %v993 = vunpack.c.0.s8 %v992
        %v994 = vlaneseq
        %v995 = vshrl.u32 %v994, 7
        %v996 = vsub.s32 %v993, %v995
        %v997 = vrot.slane %v983, %v996
        %v998 = vpack.c.bf16 %v968, %v968
        %v999 = vpack.c.bf16 %v971, %v971
        %1001 = vrot.lane.b32.xlu0 %v998, 96
        %v1002 = vpop.permute.xlu0 %1001
        %vm1003 = vcmask 130048
        %v1005 = vsel %vm1003, %v998, 0
        %v1008 = vsel %vm1003, %v1002, 0
        %1010 = vmatprep.subr.bf16.mxu0 0
        %1011 = vmatpush1.bf16.xpose.msra.mxu0 %v1008
        %1012 = vmatprep.subr.bf16.mxu0 0
        %1013 = vmatpush1.bf16.xpose.msra.mxu0 0
        %1014 = vmatprep.subr.bf16.mxu0 0
        %1015 = vmatpush1.bf16.xpose.msra.mxu0 0
        %1016 = vmatprep.subr.bf16.mxu0 0
        %1017 = vmatpush1.bf16.xpose.msra.mxu0 0
        %1018 = vmatprep.subr.bf16.mxu0 0
        %1019 = vmatpush1.bf16.xpose.msra.mxu0 0
        %1020 = vmatprep.subr.bf16.mxu0 0
        %1021 = vmatpush1.bf16.xpose.msra.mxu0 0
        %1022 = vmatprep.subr.bf16.mxu0 0
        %1023 = vmatpush1.bf16.xpose.msra.mxu0 0
        %1024 = vmatprep.subr.bf16.mxu0 0
        %1025 = vmatpush1.bf16.xpose.msra.mxu0 0
        %1026 = vmatprep.subr.bf16.mxu0 0
        %1027 = vmatpush1.bf16.xpose.msra.mxu0 0
        %1028 = vmatprep.subr.bf16.mxu0 0
        %1029 = vmatpush1.bf16.xpose.msra.mxu0 0
        %1030 = vmatprep.subr.bf16.mxu0 0
        %1031 = vmatpush1.bf16.xpose.msra.mxu0 0
        %1032 = vmatprep.subr.bf16.mxu0 0
        %1033 = vmatpush1.bf16.xpose.msra.mxu0 0
        %1034 = vmatprep.subr.bf16.mxu0 0
        %1035 = vmatpush1.bf16.xpose.msra.mxu0 0
        %1036 = vmatprep.subr.bf16.mxu0 0
        %1037 = vmatpush1.bf16.xpose.msra.mxu0 0
        %1038 = vmatprep.subr.bf16.mxu0 0
        %1039 = vmatpush1.bf16.xpose.msra.mxu0 0
        %1040 = vmatprep.subr.bf16.mxu0 0
        %1041 = vmatpush1.bf16.xpose.msra.mxu0 0
        %1042 = vmatprep.mubr.bf16.mxu0 0
        %1043 = vmatmul.mubr.bf16.gmra.mrb[0].mxu0 %v1005
        %v1044 = vpop.f32.mrb[0].mxu0
        %v1045 = vadd.f32 0.0, %v1044
        %v1046 = vpop.f32.mrb[0].mxu0
        %v1047 = vpop.f32.mrb[0].mxu0
        %v1048 = vpop.f32.mrb[0].mxu0
        %1049 = vdwg.mxu0
        %1051 = vrot.lane.b32.xlu0 %v999, 96
        %v1052 = vpop.permute.xlu0 %1051
        %v1054 = vsel %vm1003, %v999, 0
        %v1057 = vsel %vm1003, %v1052, 0
        %1059 = vmatprep.subr.bf16.mxu0 0
        %1060 = vmatpush1.bf16.xpose.msra.mxu0 %v1057
        %1061 = vmatprep.subr.bf16.mxu0 0
        %1062 = vmatpush1.bf16.xpose.msra.mxu0 0
        %1063 = vmatprep.subr.bf16.mxu0 0
        %1064 = vmatpush1.bf16.xpose.msra.mxu0 0
        %1065 = vmatprep.subr.bf16.mxu0 0
        %1066 = vmatpush1.bf16.xpose.msra.mxu0 0
        %1067 = vmatprep.subr.bf16.mxu0 0
        %1068 = vmatpush1.bf16.xpose.msra.mxu0 0
        %1069 = vmatprep.subr.bf16.mxu0 0
        %1070 = vmatpush1.bf16.xpose.msra.mxu0 0
        %1071 = vmatprep.subr.bf16.mxu0 0
        %1072 = vmatpush1.bf16.xpose.msra.mxu0 0
        %1073 = vmatprep.subr.bf16.mxu0 0
        %1074 = vmatpush1.bf16.xpose.msra.mxu0 0
        %1075 = vmatprep.subr.bf16.mxu0 0
        %1076 = vmatpush1.bf16.xpose.msra.mxu0 0
        %1077 = vmatprep.subr.bf16.mxu0 0
        %1078 = vmatpush1.bf16.xpose.msra.mxu0 0
        %1079 = vmatprep.subr.bf16.mxu0 0
        %1080 = vmatpush1.bf16.xpose.msra.mxu0 0
        %1081 = vmatprep.subr.bf16.mxu0 0
        %1082 = vmatpush1.bf16.xpose.msra.mxu0 0
        %1083 = vmatprep.subr.bf16.mxu0 0
        %1084 = vmatpush1.bf16.xpose.msra.mxu0 0
        %1085 = vmatprep.subr.bf16.mxu0 0
        %1086 = vmatpush1.bf16.xpose.msra.mxu0 0
        %1087 = vmatprep.subr.bf16.mxu0 0
        %1088 = vmatpush1.bf16.xpose.msra.mxu0 0
        %1089 = vmatprep.subr.bf16.mxu0 0
        %1090 = vmatpush1.bf16.xpose.msra.mxu0 0
        %1091 = vmatprep.mubr.bf16.mxu0 0
        %1092 = vmatmul.mubr.bf16.gmra.mrb[0].mxu0 %v1054
        %v1093 = vpop.f32.mrb[0].mxu0
        %v1094 = vadd.f32 0.0, %v1093
        %v1095 = vpop.f32.mrb[0].mxu0
        %v1096 = vpop.f32.mrb[0].mxu0
        %v1097 = vpop.f32.mrb[0].mxu0
        %1098 = vdwg.mxu0
        %v1099 = vmul.f32 %v1045, 0.25
        %v1100 = vmul.f32 %v1094, 0.25
        %v1101 = vlaneseq
        %v1102 = vshrl.u32 %v1101, 7
        %v1103 = vsub.s32 0, %v1102
        %v1104 = vrot.slane %v990, %v1103
        %v1105 = vlaneseq
        %v1106 = vshrl.u32 %v1105, 7
        %v1107 = vsub.s32 0, %v1106
        %v1108 = vrot.slane %v997, %v1107
        %v1111 = vadd.f32 %v1099, %v1104
        %v1112 = vadd.f32 %v1100, %v1108
        %vm1113 = vcmask 64512
        %v1114 = vsel %vm1113, %v1111, -inf
        %1115 = vmax.xlane.f32.xlu0 %v1114
        %v1116 = vpop.xlane.xlu0 %1115
        %v1117 = vsel %vm1113, %v1112, -inf
        %1118 = vmax.xlane.f32.xlu0 %v1117
        %v1119 = vpop.xlane.xlu0 %1118
        %v1120 = vsub.f32 %v1111, %v1116
        %v1121 = vsub.f32 %v1112, %v1119
        %v1122 = vmul.f32 %v1120, 1.442695
        %v1123 = vpow.pop %v1122
        %v1124 = vmul.f32 %v1121, 1.442695
        %v1125 = vpow.pop %v1124
        %v1126 = vsel %vm1113, %v1123, 0.0
        %1127 = vadd.xlane.f32.xlu0 %v1126
        %v1128 = vpop.xlane.xlu0 %1127
        %v1129 = vsel %vm1113, %v1125, 0.0
        %1130 = vadd.xlane.f32.xlu0 %v1129
        %v1131 = vpop.xlane.xlu0 %1130
        %v1132 = vrcp.pop %v1128
        %v1133 = vrcp.pop %v1131
        %v1134 = vmul.f32 %v1123, %v1132
        %v1135 = vmul.f32 %v1125, %v1133
        %v1136 = vpack.c.bf16 %v1134, %v1134
        %v1137 = vpack.c.bf16 %v1135, %v1135
        %1138 = vrot.lane.b32.xlu0 %v998, 64
        %v1139 = vpop.permute.xlu0 %1138
        %v1141 = vsel %vm1113, %v1136, 0
        %vm1143 = vcmask 1043456
        %v1145 = vsel %vm1143, %v1139, 0
        %1147 = vmatprep.subr.bf16.mxu0 0
        %1148 = vmatpush1.bf16.msra.mxu0 %v1145
        %1149 = vmatprep.subr.bf16.mxu0 0
        %1150 = vmatpush1.bf16.msra.mxu0 0
        %1151 = vmatprep.subr.bf16.mxu0 0
        %1152 = vmatpush1.bf16.msra.mxu0 0
        %1153 = vmatprep.subr.bf16.mxu0 0
        %1154 = vmatpush1.bf16.msra.mxu0 0
        %1155 = vmatprep.subr.bf16.mxu0 0
        %1156 = vmatpush1.bf16.msra.mxu0 0
        %1157 = vmatprep.subr.bf16.mxu0 0
        %1158 = vmatpush1.bf16.msra.mxu0 0
        %1159 = vmatprep.subr.bf16.mxu0 0
        %1160 = vmatpush1.bf16.msra.mxu0 0
        %1161 = vmatprep.subr.bf16.mxu0 0
        %1162 = vmatpush1.bf16.msra.mxu0 0
        %1163 = vmatprep.subr.bf16.mxu0 0
        %1164 = vmatpush1.bf16.msra.mxu0 0
        %1165 = vmatprep.subr.bf16.mxu0 0
        %1166 = vmatpush1.bf16.msra.mxu0 0
        %1167 = vmatprep.subr.bf16.mxu0 0
        %1168 = vmatpush1.bf16.msra.mxu0 0
        %1169 = vmatprep.subr.bf16.mxu0 0
        %1170 = vmatpush1.bf16.msra.mxu0 0
        %1171 = vmatprep.subr.bf16.mxu0 0
        %1172 = vmatpush1.bf16.msra.mxu0 0
        %1173 = vmatprep.subr.bf16.mxu0 0
        %1174 = vmatpush1.bf16.msra.mxu0 0
        %1175 = vmatprep.subr.bf16.mxu0 0
        %1176 = vmatpush1.bf16.msra.mxu0 0
        %1177 = vmatprep.subr.bf16.mxu0 0
        %1178 = vmatpush1.bf16.msra.mxu0 0
        %1179 = vmatprep.mubr.bf16.mxu0 0
        %1180 = vmatmul.mubr.bf16.gmra.mrb[0].mxu0 %v1141
        %v1181 = vpop.f32.mrb[0].mxu0
        %v1182 = vadd.f32 0.0, %v1181
        %v1183 = vpop.f32.mrb[0].mxu0
        %v1184 = vpop.f32.mrb[0].mxu0
        %v1185 = vpop.f32.mrb[0].mxu0
        %1186 = vdwg.mxu0
        %1187 = vrot.lane.b32.xlu0 %v999, 64
        %v1188 = vpop.permute.xlu0 %1187
        %v1190 = vsel %vm1113, %v1137, 0
        %v1193 = vsel %vm1143, %v1188, 0
        %1195 = vmatprep.subr.bf16.mxu0 0
        %1196 = vmatpush1.bf16.msra.mxu0 %v1193
        %1197 = vmatprep.subr.bf16.mxu0 0
        %1198 = vmatpush1.bf16.msra.mxu0 0
        %1199 = vmatprep.subr.bf16.mxu0 0
        %1200 = vmatpush1.bf16.msra.mxu0 0
        %1201 = vmatprep.subr.bf16.mxu0 0
        %1202 = vmatpush1.bf16.msra.mxu0 0
        %1203 = vmatprep.subr.bf16.mxu0 0
        %1204 = vmatpush1.bf16.msra.mxu0 0
        %1205 = vmatprep.subr.bf16.mxu0 0
        %1206 = vmatpush1.bf16.msra.mxu0 0
        %1207 = vmatprep.subr.bf16.mxu0 0
        %1208 = vmatpush1.bf16.msra.mxu0 0
        %1209 = vmatprep.subr.bf16.mxu0 0
        %1210 = vmatpush1.bf16.msra.mxu0 0
        %1211 = vmatprep.subr.bf16.mxu0 0
        %1212 = vmatpush1.bf16.msra.mxu0 0
        %1213 = vmatprep.subr.bf16.mxu0 0
        %1214 = vmatpush1.bf16.msra.mxu0 0
        %1215 = vmatprep.subr.bf16.mxu0 0
        %1216 = vmatpush1.bf16.msra.mxu0 0
        %1217 = vmatprep.subr.bf16.mxu0 0
        %1218 = vmatpush1.bf16.msra.mxu0 0
        %1219 = vmatprep.subr.bf16.mxu0 0
        %1220 = vmatpush1.bf16.msra.mxu0 0
        %1221 = vmatprep.subr.bf16.mxu0 0
        %1222 = vmatpush1.bf16.msra.mxu0 0
        %1223 = vmatprep.subr.bf16.mxu0 0
        %1224 = vmatpush1.bf16.msra.mxu0 0
        %1225 = vmatprep.subr.bf16.mxu0 0
        %1226 = vmatpush1.bf16.msra.mxu0 0
        %1227 = vmatprep.mubr.bf16.mxu0 0
        %1228 = vmatmul.mubr.bf16.gmra.mrb[0].mxu0 %v1190
        %v1229 = vpop.f32.mrb[0].mxu0
        %v1230 = vadd.f32 0.0, %v1229
        %v1231 = vpop.f32.mrb[0].mxu0
        %v1232 = vpop.f32.mrb[0].mxu0
        %v1233 = vpop.f32.mrb[0].mxu0
        %1234 = vdwg.mxu0
        %1235 = vrot.lane.b32.xlu0 %v998, 112
        %v1236 = vpop.permute.xlu0 %1235
        %1237 = vrot.lane.b32.xlu0 %v998, 80
        %v1238 = vpop.permute.xlu0 %1237
        %v1240 = vsel %vm1003, %v1236, 0
        %v1243 = vsel %vm1003, %v1238, 0
        %1245 = vmatprep.subr.bf16.mxu0 0
        %1246 = vmatpush1.bf16.xpose.msra.mxu0 %v1243
        %1247 = vmatprep.subr.bf16.mxu0 0
        %1248 = vmatpush1.bf16.xpose.msra.mxu0 0
        %1249 = vmatprep.subr.bf16.mxu0 0
        %1250 = vmatpush1.bf16.xpose.msra.mxu0 0
        %1251 = vmatprep.subr.bf16.mxu0 0
        %1252 = vmatpush1.bf16.xpose.msra.mxu0 0
        %1253 = vmatprep.subr.bf16.mxu0 0
        %1254 = vmatpush1.bf16.xpose.msra.mxu0 0
        %1255 = vmatprep.subr.bf16.mxu0 0
        %1256 = vmatpush1.bf16.xpose.msra.mxu0 0
        %1257 = vmatprep.subr.bf16.mxu0 0
        %1258 = vmatpush1.bf16.xpose.msra.mxu0 0
        %1259 = vmatprep.subr.bf16.mxu0 0
        %1260 = vmatpush1.bf16.xpose.msra.mxu0 0
        %1261 = vmatprep.subr.bf16.mxu0 0
        %1262 = vmatpush1.bf16.xpose.msra.mxu0 0
        %1263 = vmatprep.subr.bf16.mxu0 0
        %1264 = vmatpush1.bf16.xpose.msra.mxu0 0
        %1265 = vmatprep.subr.bf16.mxu0 0
        %1266 = vmatpush1.bf16.xpose.msra.mxu0 0
        %1267 = vmatprep.subr.bf16.mxu0 0
        %1268 = vmatpush1.bf16.xpose.msra.mxu0 0
        %1269 = vmatprep.subr.bf16.mxu0 0
        %1270 = vmatpush1.bf16.xpose.msra.mxu0 0
        %1271 = vmatprep.subr.bf16.mxu0 0
        %1272 = vmatpush1.bf16.xpose.msra.mxu0 0
        %1273 = vmatprep.subr.bf16.mxu0 0
        %1274 = vmatpush1.bf16.xpose.msra.mxu0 0
        %1275 = vmatprep.subr.bf16.mxu0 0
        %1276 = vmatpush1.bf16.xpose.msra.mxu0 0
        %1277 = vmatprep.mubr.bf16.mxu0 0
        %1278 = vmatmul.mubr.bf16.gmra.mrb[0].mxu0 %v1240
        %v1279 = vpop.f32.mrb[0].mxu0
        %v1280 = vadd.f32 0.0, %v1279
        %v1281 = vpop.f32.mrb[0].mxu0
        %v1282 = vpop.f32.mrb[0].mxu0
        %v1283 = vpop.f32.mrb[0].mxu0
        %1284 = vdwg.mxu0
        %1285 = vrot.lane.b32.xlu0 %v999, 112
        %v1286 = vpop.permute.xlu0 %1285
        %1287 = vrot.lane.b32.xlu0 %v999, 80
        %v1288 = vpop.permute.xlu0 %1287
        %v1290 = vsel %vm1003, %v1286, 0
        %v1293 = vsel %vm1003, %v1288, 0
        %1295 = vmatprep.subr.bf16.mxu0 0
        %1296 = vmatpush1.bf16.xpose.msra.mxu0 %v1293
        %1297 = vmatprep.subr.bf16.mxu0 0
        %1298 = vmatpush1.bf16.xpose.msra.mxu0 0
        %1299 = vmatprep.subr.bf16.mxu0 0
        %1300 = vmatpush1.bf16.xpose.msra.mxu0 0
        %1301 = vmatprep.subr.bf16.mxu0 0
        %1302 = vmatpush1.bf16.xpose.msra.mxu0 0
        %1303 = vmatprep.subr.bf16.mxu0 0
        %1304 = vmatpush1.bf16.xpose.msra.mxu0 0
        %1305 = vmatprep.subr.bf16.mxu0 0
        %1306 = vmatpush1.bf16.xpose.msra.mxu0 0
        %1307 = vmatprep.subr.bf16.mxu0 0
        %1308 = vmatpush1.bf16.xpose.msra.mxu0 0
        %1309 = vmatprep.subr.bf16.mxu0 0
        %1310 = vmatpush1.bf16.xpose.msra.mxu0 0
        %1311 = vmatprep.subr.bf16.mxu0 0
        %1312 = vmatpush1.bf16.xpose.msra.mxu0 0
        %1313 = vmatprep.subr.bf16.mxu0 0
        %1314 = vmatpush1.bf16.xpose.msra.mxu0 0
        %1315 = vmatprep.subr.bf16.mxu0 0
        %1316 = vmatpush1.bf16.xpose.msra.mxu0 0
        %1317 = vmatprep.subr.bf16.mxu0 0
        %1318 = vmatpush1.bf16.xpose.msra.mxu0 0
        %1319 = vmatprep.subr.bf16.mxu0 0
        %1320 = vmatpush1.bf16.xpose.msra.mxu0 0
        %1321 = vmatprep.subr.bf16.mxu0 0
        %1322 = vmatpush1.bf16.xpose.msra.mxu0 0
        %1323 = vmatprep.subr.bf16.mxu0 0
        %1324 = vmatpush1.bf16.xpose.msra.mxu0 0
        %1325 = vmatprep.subr.bf16.mxu0 0
        %1326 = vmatpush1.bf16.xpose.msra.mxu0 0
        %1327 = vmatprep.mubr.bf16.mxu0 0
        %1328 = vmatmul.mubr.bf16.gmra.mrb[0].mxu0 %v1290
        %v1329 = vpop.f32.mrb[0].mxu0
        %v1330 = vadd.f32 0.0, %v1329
        %v1331 = vpop.f32.mrb[0].mxu0
        %v1332 = vpop.f32.mrb[0].mxu0
        %v1333 = vpop.f32.mrb[0].mxu0
        %1334 = vdwg.mxu0
        %v1335 = vmul.f32 %v1280, 0.25
        %v1336 = vmul.f32 %v1330, 0.25
        %v1337 = vadd.f32 %v1335, %v1104
        %v1338 = vadd.f32 %v1336, %v1108
        %v1339 = vsel %vm1113, %v1337, -inf
        %1340 = vmax.xlane.f32.xlu0 %v1339
        %v1341 = vpop.xlane.xlu0 %1340
        %v1342 = vsel %vm1113, %v1338, -inf
        %1343 = vmax.xlane.f32.xlu0 %v1342
        %v1344 = vpop.xlane.xlu0 %1343
        %v1345 = vsub.f32 %v1337, %v1341
        %v1346 = vsub.f32 %v1338, %v1344
        %v1347 = vmul.f32 %v1345, 1.442695
        %v1348 = vpow.pop %v1347
        %v1349 = vmul.f32 %v1346, 1.442695
        %v1350 = vpow.pop %v1349
        %v1351 = vsel %vm1113, %v1348, 0.0
        %1352 = vadd.xlane.f32.xlu0 %v1351
        %v1353 = vpop.xlane.xlu0 %1352
        %v1354 = vsel %vm1113, %v1350, 0.0
        %1355 = vadd.xlane.f32.xlu0 %v1354
        %v1356 = vpop.xlane.xlu0 %1355
        %v1357 = vrcp.pop %v1353
        %v1358 = vrcp.pop %v1356
        %v1359 = vmul.f32 %v1348, %v1357
        %v1360 = vmul.f32 %v1350, %v1358
        %v1361 = vpack.c.bf16 %v1359, %v1359
        %v1362 = vpack.c.bf16 %v1360, %v1360
        %1363 = vrot.lane.b32.xlu0 %v998, 48
        %v1364 = vpop.permute.xlu0 %1363
        %v1366 = vsel %vm1113, %v1361, 0
        %v1369 = vsel %vm1143, %v1364, 0
        %1371 = vmatprep.subr.bf16.mxu0 0
        %1372 = vmatpush1.bf16.msra.mxu0 %v1369
        %1373 = vmatprep.subr.bf16.mxu0 0
        %1374 = vmatpush1.bf16.msra.mxu0 0
        %1375 = vmatprep.subr.bf16.mxu0 0
        %1376 = vmatpush1.bf16.msra.mxu0 0
        %1377 = vmatprep.subr.bf16.mxu0 0
        %1378 = vmatpush1.bf16.msra.mxu0 0
        %1379 = vmatprep.subr.bf16.mxu0 0
        %1380 = vmatpush1.bf16.msra.mxu0 0
        %1381 = vmatprep.subr.bf16.mxu0 0
        %1382 = vmatpush1.bf16.msra.mxu0 0
        %1383 = vmatprep.subr.bf16.mxu0 0
        %1384 = vmatpush1.bf16.msra.mxu0 0
        %1385 = vmatprep.subr.bf16.mxu0 0
        %1386 = vmatpush1.bf16.msra.mxu0 0
        %1387 = vmatprep.subr.bf16.mxu0 0
        %1388 = vmatpush1.bf16.msra.mxu0 0
        %1389 = vmatprep.subr.bf16.mxu0 0
        %1390 = vmatpush1.bf16.msra.mxu0 0
        %1391 = vmatprep.subr.bf16.mxu0 0
        %1392 = vmatpush1.bf16.msra.mxu0 0
        %1393 = vmatprep.subr.bf16.mxu0 0
        %1394 = vmatpush1.bf16.msra.mxu0 0
        %1395 = vmatprep.subr.bf16.mxu0 0
        %1396 = vmatpush1.bf16.msra.mxu0 0
        %1397 = vmatprep.subr.bf16.mxu0 0
        %1398 = vmatpush1.bf16.msra.mxu0 0
        %1399 = vmatprep.subr.bf16.mxu0 0
        %1400 = vmatpush1.bf16.msra.mxu0 0
        %1401 = vmatprep.subr.bf16.mxu0 0
        %1402 = vmatpush1.bf16.msra.mxu0 0
        %1403 = vmatprep.mubr.bf16.mxu0 0
        %1404 = vmatmul.mubr.bf16.gmra.mrb[0].mxu0 %v1366
        %v1405 = vpop.f32.mrb[0].mxu0
        %v1406 = vadd.f32 0.0, %v1405
        %v1407 = vpop.f32.mrb[0].mxu0
        %v1408 = vpop.f32.mrb[0].mxu0
        %v1409 = vpop.f32.mrb[0].mxu0
        %1410 = vdwg.mxu0
        %1411 = vrot.lane.b32.xlu0 %v999, 48
        %v1412 = vpop.permute.xlu0 %1411
        %v1414 = vsel %vm1113, %v1362, 0
        %v1417 = vsel %vm1143, %v1412, 0
        %1419 = vmatprep.subr.bf16.mxu0 0
        %1420 = vmatpush1.bf16.msra.mxu0 %v1417
        %1421 = vmatprep.subr.bf16.mxu0 0
        %1422 = vmatpush1.bf16.msra.mxu0 0
        %1423 = vmatprep.subr.bf16.mxu0 0
        %1424 = vmatpush1.bf16.msra.mxu0 0
        %1425 = vmatprep.subr.bf16.mxu0 0
        %1426 = vmatpush1.bf16.msra.mxu0 0
        %1427 = vmatprep.subr.bf16.mxu0 0
        %1428 = vmatpush1.bf16.msra.mxu0 0
        %1429 = vmatprep.subr.bf16.mxu0 0
        %1430 = vmatpush1.bf16.msra.mxu0 0
        %1431 = vmatprep.subr.bf16.mxu0 0
        %1432 = vmatpush1.bf16.msra.mxu0 0
        %1433 = vmatprep.subr.bf16.mxu0 0
        %1434 = vmatpush1.bf16.msra.mxu0 0
        %1435 = vmatprep.subr.bf16.mxu0 0
        %1436 = vmatpush1.bf16.msra.mxu0 0
        %1437 = vmatprep.subr.bf16.mxu0 0
        %1438 = vmatpush1.bf16.msra.mxu0 0
        %1439 = vmatprep.subr.bf16.mxu0 0
        %1440 = vmatpush1.bf16.msra.mxu0 0
        %1441 = vmatprep.subr.bf16.mxu0 0
        %1442 = vmatpush1.bf16.msra.mxu0 0
        %1443 = vmatprep.subr.bf16.mxu0 0
        %1444 = vmatpush1.bf16.msra.mxu0 0
        %1445 = vmatprep.subr.bf16.mxu0 0
        %1446 = vmatpush1.bf16.msra.mxu0 0
        %1447 = vmatprep.subr.bf16.mxu0 0
        %1448 = vmatpush1.bf16.msra.mxu0 0
        %1449 = vmatprep.subr.bf16.mxu0 0
        %1450 = vmatpush1.bf16.msra.mxu0 0
        %1451 = vmatprep.mubr.bf16.mxu0 0
        %1452 = vmatmul.mubr.bf16.gmra.mrb[0].mxu0 %v1414
        %v1453 = vpop.f32.mrb[0].mxu0
        %v1454 = vadd.f32 0.0, %v1453
        %v1455 = vpop.f32.mrb[0].mxu0
        %v1456 = vpop.f32.mrb[0].mxu0
        %v1457 = vpop.f32.mrb[0].mxu0
        %1458 = vdwg.mxu0
        %1461 = vrot.lane.b32.xlu0 %v1406, 16
        %v1462 = vpop.permute.xlu0 %1461
        %1463 = vrot.lane.b32.xlu0 %v1454, 16
        %v1464 = vpop.permute.xlu0 %1463
        %v1467 = vsel %vm1003, %v1182, %v1462
        %v1468 = vsel %vm1003, %v1230, %v1464
        %v1469 = vpack.c.bf16 %v1468, %v1467
        %v1470 = vld [vmem:[%s810] sm:$0xf]
        %v1471 = vld [vmem:[%s810 + $0x4] sm:$0xf]
        %v1472 = vld [vmem:[%s810 + $0x8] sm:$0xf]
        %v1473 = vld [vmem:[%s810 + $0xc] sm:$0xf]
        %v1474 = vld [vmem:[%s813] sm:$0x1]
        %v1476 = vlaneseq
        %v1477 = vshrl.u32 %v1476, 7
        %v1478 = vsub.s32 0, %v1477
        %v1479 = vrot.slane %v1474, %v1478
        %v1485 = vunpack.c.l.b16 %v1470
        %v1486 = vunpack.c.l.b16 %v1471
        %v1487 = vunpack.c.l.b16 %v1472
        %v1488 = vunpack.c.l.b16 %v1473
        %v1489 = vpack.c.b16 %v1486, %v1485
        %v1490 = vpack.c.b16 %v1488, %v1487
        %v1494 = vsel %vm929, %v1469, 0
        %1496 = vmatprep.subr.bf16.mxu0 0
        %1497 = vmatpush1.bf16.msra.mxu0 %v1489
        %1498 = vmatprep.subr.bf16.mxu0 0
        %1499 = vmatpush1.bf16.msra.mxu0 %v1490
        %1500 = vmatprep.subr.bf16.mxu0 0
        %1501 = vmatpush1.bf16.msra.mxu0 0
        %1502 = vmatprep.subr.bf16.mxu0 0
        %1503 = vmatpush1.bf16.msra.mxu0 0
        %1504 = vmatprep.subr.bf16.mxu0 0
        %1505 = vmatpush1.bf16.msra.mxu0 0
        %1506 = vmatprep.subr.bf16.mxu0 0
        %1507 = vmatpush1.bf16.msra.mxu0 0
        %1508 = vmatprep.subr.bf16.mxu0 0
        %1509 = vmatpush1.bf16.msra.mxu0 0
        %1510 = vmatprep.subr.bf16.mxu0 0
        %1511 = vmatpush1.bf16.msra.mxu0 0
        %1512 = vmatprep.subr.bf16.mxu0 0
        %1513 = vmatpush1.bf16.msra.mxu0 0
        %1514 = vmatprep.subr.bf16.mxu0 0
        %1515 = vmatpush1.bf16.msra.mxu0 0
        %1516 = vmatprep.subr.bf16.mxu0 0
        %1517 = vmatpush1.bf16.msra.mxu0 0
        %1518 = vmatprep.subr.bf16.mxu0 0
        %1519 = vmatpush1.bf16.msra.mxu0 0
        %1520 = vmatprep.subr.bf16.mxu0 0
        %1521 = vmatpush1.bf16.msra.mxu0 0
        %1522 = vmatprep.subr.bf16.mxu0 0
        %1523 = vmatpush1.bf16.msra.mxu0 0
        %1524 = vmatprep.subr.bf16.mxu0 0
        %1525 = vmatpush1.bf16.msra.mxu0 0
        %1526 = vmatprep.subr.bf16.mxu0 0
        %1527 = vmatpush1.bf16.msra.mxu0 0
        %1528 = vmatprep.mubr.bf16.mxu0 0
        %1529 = vmatmul.mubr.bf16.gmra.mrb[0].mxu0 %v1494
        %v1530 = vpop.f32.mrb[0].mxu0
        %v1531 = vadd.f32 %v1479, %v1530
        %v1532 = vpop.f32.mrb[0].mxu0
        %v1533 = vpop.f32.mrb[0].mxu0
        %v1534 = vadd.f32 %v1479, %v1533
        %v1535 = vpop.f32.mrb[0].mxu0
        %1536 = vdwg.mxu0
        %v1537 = vadd.f32 %v903, %v1531
        %v1538 = vadd.f32 %v904, %v1534
        %v1539 = vld [vmem:[%s816] sm:$0x1]
        %v1540 = vld [vmem:[%s819] sm:$0x1]
        %v1541 = vsel %vm929, %v1537, 0.0
        %1542 = vadd.xlane.f32.xlu0 %v1541
        %v1543 = vpop.xlane.xlu0 %1542
        %v1544 = vsel %vm929, %v1538, 0.0
        %1545 = vadd.xlane.f32.xlu0 %v1544
        %v1546 = vpop.xlane.xlu0 %1545
        %v1547 = vrcp.pop 32.0
        %v1548 = vmul.f32 %v1543, %v1547
        %v1549 = vmul.f32 %v1546, %v1547
        %v1550 = vmul.f32 %v1537, %v1537
        %v1551 = vmul.f32 %v1538, %v1538
        %v1552 = vsel %vm929, %v1550, 0.0
        %1553 = vadd.xlane.f32.xlu0 %v1552
        %v1554 = vpop.xlane.xlu0 %1553
        %v1555 = vsel %vm929, %v1551, 0.0
        %1556 = vadd.xlane.f32.xlu0 %v1555
        %v1557 = vpop.xlane.xlu0 %1556
        %v1558 = vmul.f32 %v1554, %v1547
        %v1559 = vmul.f32 %v1557, %v1547
        %v1560 = vmul.f32 %v1548, %v1548
        %v1561 = vmul.f32 %v1549, %v1549
        %v1562 = vsub.f32 %v1558, %v1560
        %v1563 = vsub.f32 %v1559, %v1561
        %v1564 = vmax.f32 %v1562, 0.0
        %v1565 = vmax.f32 %v1563, 0.0
        %v1566 = vsub.f32 %v1537, %v1548
        %v1567 = vsub.f32 %v1538, %v1549
        %v1568 = vadd.f32 %v1564, 1e-12
        %v1569 = vadd.f32 %v1565, 1e-12
        %v1570 = vrsqrt.pop %v1568
        %v1571 = vrsqrt.pop %v1569
        %v1572 = vmul.f32 %v1566, %v1570
        %v1573 = vmul.f32 %v1567, %v1571
        %v1575 = vlaneseq
        %v1576 = vshrl.u32 %v1575, 7
        %v1577 = vsub.s32 0, %v1576
        %v1578 = vrot.slane %v1539, %v1577
        %v1580 = vmul.f32 %v1572, %v1578
        %v1581 = vmul.f32 %v1573, %v1578
        %v1583 = vlaneseq
        %v1584 = vshrl.u32 %v1583, 7
        %v1585 = vsub.s32 0, %v1584
        %v1586 = vrot.slane %v1540, %v1585
        %v1588 = vadd.f32 %v1580, %v1586
        %v1589 = vadd.f32 %v1581, %v1586
        %v1590 = vpack.c.bf16 %v1589, %v1588
        %v1591 = vld [vmem:[%s824] sm:$0xf]
        %v1592 = vld [vmem:[%s824 + $0x4] sm:$0xf]
        %v1593 = vld [vmem:[%s824 + $0x8] sm:$0xf]
        %v1594 = vld [vmem:[%s824 + $0xc] sm:$0xf]
        %v1595 = vld [vmem:[%s827] sm:$0x1]
        %v1597 = vlaneseq
        %v1598 = vshrl.u32 %v1597, 7
        %v1599 = vsub.s32 0, %v1598
        %v1600 = vrot.slane %v1595, %v1599
        %v1606 = vunpack.c.l.b16 %v1591
        %v1607 = vunpack.c.l.b16 %v1592
        %v1608 = vunpack.c.l.b16 %v1593
        %v1609 = vunpack.c.l.b16 %v1594
        %v1610 = vpack.c.b16 %v1607, %v1606
        %v1611 = vpack.c.b16 %v1609, %v1608
        %v1615 = vsel %vm929, %v1590, 0
        %1617 = vmatprep.subr.bf16.mxu0 0
        %1618 = vmatpush1.bf16.msra.mxu0 %v1610
        %1619 = vmatprep.subr.bf16.mxu0 0
        %1620 = vmatpush1.bf16.msra.mxu0 %v1611
        %1621 = vmatprep.subr.bf16.mxu0 0
        %1622 = vmatpush1.bf16.msra.mxu0 0
        %1623 = vmatprep.subr.bf16.mxu0 0
        %1624 = vmatpush1.bf16.msra.mxu0 0
        %1625 = vmatprep.subr.bf16.mxu0 0
        %1626 = vmatpush1.bf16.msra.mxu0 0
        %1627 = vmatprep.subr.bf16.mxu0 0
        %1628 = vmatpush1.bf16.msra.mxu0 0
        %1629 = vmatprep.subr.bf16.mxu0 0
        %1630 = vmatpush1.bf16.msra.mxu0 0
        %1631 = vmatprep.subr.bf16.mxu0 0
        %1632 = vmatpush1.bf16.msra.mxu0 0
        %1633 = vmatprep.subr.bf16.mxu0 0
        %1634 = vmatpush1.bf16.msra.mxu0 0
        %1635 = vmatprep.subr.bf16.mxu0 0
        %1636 = vmatpush1.bf16.msra.mxu0 0
        %1637 = vmatprep.subr.bf16.mxu0 0
        %1638 = vmatpush1.bf16.msra.mxu0 0
        %1639 = vmatprep.subr.bf16.mxu0 0
        %1640 = vmatpush1.bf16.msra.mxu0 0
        %1641 = vmatprep.subr.bf16.mxu0 0
        %1642 = vmatpush1.bf16.msra.mxu0 0
        %1643 = vmatprep.subr.bf16.mxu0 0
        %1644 = vmatpush1.bf16.msra.mxu0 0
        %1645 = vmatprep.subr.bf16.mxu0 0
        %1646 = vmatpush1.bf16.msra.mxu0 0
        %1647 = vmatprep.subr.bf16.mxu0 0
        %1648 = vmatpush1.bf16.msra.mxu0 0
        %1649 = vmatprep.mubr.bf16.mxu0 0
        %1650 = vmatmul.mubr.bf16.gmra.mrb[0].mxu0 %v1615
        %v1651 = vpop.f32.mrb[0].mxu0
        %v1652 = vadd.f32 %v1600, %v1651
        %v1653 = vpop.f32.mrb[0].mxu0
        %v1654 = vpop.f32.mrb[0].mxu0
        %v1655 = vadd.f32 %v1600, %v1654
        %v1656 = vpop.f32.mrb[0].mxu0
        %1657 = vdwg.mxu0
        %v1658 = vmul.f32 %v1652, 0.5
        %v1659 = vmul.f32 %v1655, 0.5
        %v1660 = vmul.f32 %v1652, 0.044715
        %v1661 = vmul.f32 %v1655, 0.044715
        %v1662 = vmul.f32 %v1660, %v1652
        %v1663 = vmul.f32 %v1661, %v1655
        %v1664 = vmul.f32 %v1662, %v1652
        %v1665 = vmul.f32 %v1663, %v1655
        %v1666 = vadd.f32 %v1652, %v1664
        %v1667 = vadd.f32 %v1655, %v1665
        %v1668 = vmul.f32 %v1666, 0.7978846
        %v1669 = vmul.f32 %v1667, 0.7978846
        %v1670 = vtanh.pop %v1668
        %v1671 = vtanh.pop %v1669
        %v1672 = vadd.f32 %v1670, 1.0
        %v1673 = vadd.f32 %v1671, 1.0
        %v1674 = vmul.f32 %v1658, %v1672
        %v1675 = vmul.f32 %v1659, %v1673
        %v1676 = vpack.c.bf16 %v1675, %v1674
        %v1677 = vld [vmem:[%s832] sm:$0xf]
        %v1678 = vld [vmem:[%s832 + $0x4] sm:$0xf]
        %v1679 = vld [vmem:[%s832 + $0x8] sm:$0xf]
        %v1680 = vld [vmem:[%s832 + $0xc] sm:$0xf]
        %v1681 = vld [vmem:[%s832 + $0x10] sm:$0xf]
        %v1682 = vld [vmem:[%s832 + $0x14] sm:$0xf]
        %v1683 = vld [vmem:[%s832 + $0x18] sm:$0xf]
        %v1684 = vld [vmem:[%s832 + $0x1c] sm:$0xf]
        %v1685 = vld [vmem:[%s835] sm:$0x1]
        %v1687 = vlaneseq
        %v1688 = vshrl.u32 %v1687, 7
        %v1689 = vsub.s32 0, %v1688
        %v1690 = vrot.slane %v1685, %v1689
        %v1700 = vunpack.c.l.b16 %v1677
        %v1701 = vunpack.c.l.b16 %v1678
        %v1702 = vunpack.c.l.b16 %v1679
        %v1703 = vunpack.c.l.b16 %v1680
        %v1704 = vunpack.c.l.b16 %v1681
        %v1705 = vunpack.c.l.b16 %v1682
        %v1706 = vunpack.c.l.b16 %v1683
        %v1707 = vunpack.c.l.b16 %v1684
        %v1708 = vpack.c.b16 %v1701, %v1700
        %v1709 = vpack.c.b16 %v1703, %v1702
        %v1710 = vpack.c.b16 %v1705, %v1704
        %v1711 = vpack.c.b16 %v1707, %v1706
        %vm1716 = vcmask 523264
        %v1718 = vsel %vm1716, %v1676, 0
        %1720 = vmatprep.subr.bf16.mxu0 0
        %1721 = vmatpush1.bf16.msra.mxu0 %v1708
        %1722 = vmatprep.subr.bf16.mxu0 0
        %1723 = vmatpush1.bf16.msra.mxu0 %v1709
        %1724 = vmatprep.subr.bf16.mxu0 0
        %1725 = vmatpush1.bf16.msra.mxu0 %v1710
        %1726 = vmatprep.subr.bf16.mxu0 0
        %1727 = vmatpush1.bf16.msra.mxu0 %v1711
        %1728 = vmatprep.subr.bf16.mxu0 0
        %1729 = vmatpush1.bf16.msra.mxu0 0
        %1730 = vmatprep.subr.bf16.mxu0 0
        %1731 = vmatpush1.bf16.msra.mxu0 0
        %1732 = vmatprep.subr.bf16.mxu0 0
        %1733 = vmatpush1.bf16.msra.mxu0 0
        %1734 = vmatprep.subr.bf16.mxu0 0
        %1735 = vmatpush1.bf16.msra.mxu0 0
        %1736 = vmatprep.subr.bf16.mxu0 0
        %1737 = vmatpush1.bf16.msra.mxu0 0
        %1738 = vmatprep.subr.bf16.mxu0 0
        %1739 = vmatpush1.bf16.msra.mxu0 0
        %1740 = vmatprep.subr.bf16.mxu0 0
        %1741 = vmatpush1.bf16.msra.mxu0 0
        %1742 = vmatprep.subr.bf16.mxu0 0
        %1743 = vmatpush1.bf16.msra.mxu0 0
        %1744 = vmatprep.subr.bf16.mxu0 0
        %1745 = vmatpush1.bf16.msra.mxu0 0
        %1746 = vmatprep.subr.bf16.mxu0 0
        %1747 = vmatpush1.bf16.msra.mxu0 0
        %1748 = vmatprep.subr.bf16.mxu0 0
        %1749 = vmatpush1.bf16.msra.mxu0 0
        %1750 = vmatprep.subr.bf16.mxu0 0
        %1751 = vmatpush1.bf16.msra.mxu0 0
        %1752 = vmatprep.mubr.bf16.mxu0 0
        %1753 = vmatmul.mubr.bf16.gmra.mrb[0].mxu0 %v1718
        %v1754 = vpop.f32.mrb[0].mxu0
        %v1755 = vadd.f32 %v1690, %v1754
        %v1756 = vpop.f32.mrb[0].mxu0
        %v1757 = vpop.f32.mrb[0].mxu0
        %v1758 = vadd.f32 %v1690, %v1757
        %v1759 = vpop.f32.mrb[0].mxu0
        %1760 = vdwg.mxu0
        %v1761 = vadd.f32 %v1588, %v1755
        %v1762 = vadd.f32 %v1589, %v1758
        %v1763 = vld [vmem:[%s838] sm:$0x1]
        %v1764 = vld [vmem:[%s841] sm:$0x1]
        %v1765 = vsel %vm929, %v1761, 0.0
        %1766 = vadd.xlane.f32.xlu0 %v1765
        %v1767 = vpop.xlane.xlu0 %1766
        %v1768 = vsel %vm929, %v1762, 0.0
        %1769 = vadd.xlane.f32.xlu0 %v1768
        %v1770 = vpop.xlane.xlu0 %1769
        %v1771 = vmul.f32 %v1767, %v1547
        %v1772 = vmul.f32 %v1770, %v1547
        %v1773 = vmul.f32 %v1761, %v1761
        %v1774 = vmul.f32 %v1762, %v1762
        %v1775 = vsel %vm929, %v1773, 0.0
        %1776 = vadd.xlane.f32.xlu0 %v1775
        %v1777 = vpop.xlane.xlu0 %1776
        %v1778 = vsel %vm929, %v1774, 0.0
        %1779 = vadd.xlane.f32.xlu0 %v1778
        %v1780 = vpop.xlane.xlu0 %1779
        %v1781 = vmul.f32 %v1777, %v1547
        %v1782 = vmul.f32 %v1780, %v1547
        %v1783 = vmul.f32 %v1771, %v1771
        %v1784 = vmul.f32 %v1772, %v1772
        %v1785 = vsub.f32 %v1781, %v1783
        %v1786 = vsub.f32 %v1782, %v1784
        %v1787 = vmax.f32 %v1785, 0.0
        %v1788 = vmax.f32 %v1786, 0.0
        %v1789 = vsub.f32 %v1761, %v1771
        %v1790 = vsub.f32 %v1762, %v1772
        %v1791 = vadd.f32 %v1787, 1e-12
        %v1792 = vadd.f32 %v1788, 1e-12
        %v1793 = vrsqrt.pop %v1791
        %v1794 = vrsqrt.pop %v1792
        %v1795 = vmul.f32 %v1789, %v1793
        %v1796 = vmul.f32 %v1790, %v1794
        %v1798 = vlaneseq
        %v1799 = vshrl.u32 %v1798, 7
        %v1800 = vsub.s32 0, %v1799
        %v1801 = vrot.slane %v1763, %v1800
        %v1803 = vmul.f32 %v1795, %v1801
        %v1804 = vmul.f32 %v1796, %v1801
        %v1806 = vlaneseq
        %v1807 = vshrl.u32 %v1806, 7
        %v1808 = vsub.s32 0, %v1807
        %v1809 = vrot.slane %v1764, %v1808
        %v1811 = vadd.f32 %v1803, %v1809
        %v1812 = vadd.f32 %v1804, %v1809
        %1813 = vst.msk [vmem:[#allocation2] sm:$0xff] %vm929, %v1811
        %1814 = vst.msk [vmem:[#allocation2 + $0x8] sm:$0xff] %vm929, %v1812
        %p1815 = scmp.eq.s32.totalorder %s34, 1
        // Predicated region
        $region113: #{base_bert_forward.1} parent=107 // pred_check
          %p1816 = pneg %p1815
        $region114: #{base_bert_forward.1} parent=107 // pred_check_branch
          %1818 = sbr.rel (%p1816) target = $region116
        $region115: #{base_bert_forward.1} parent=107 // pred_region
          %v1819 = vpack.c.bf16 %v1811, %v1811
          %v1820 = vpack.c.bf16 %v1812, %v1812
          %v1821 = vld [vmem:[%s16] sm:$0xf]
          %v1822 = vld [vmem:[%s16 + $0x4] sm:$0xf]
          %v1823 = vld [vmem:[%s16 + $0x8] sm:$0xf]
          %v1824 = vld [vmem:[%s16 + $0xc] sm:$0xf]
          %v1825 = vld [vmem:[%s17] sm:$0x1]
          %v1827 = vlaneseq
          %v1828 = vshrl.u32 %v1827, 7
          %v1829 = vsub.s32 0, %v1828
          %v1830 = vrot.slane %v1825, %v1829
          %v1834 = vunpack.c.l.b16 %v1819
          %v1835 = vunpack.c.l.b16 %v1820
          %v1836 = vrot.slane %v1835, 7
          %vm1837 = vcmask 1041409
          %v1838 = vsel %vm1837, %v1836, %v1834
          %v1839 = vpack.c.b16 %v1838, %v1838
          %v1844 = vunpack.c.l.b16 %v1821
          %v1845 = vunpack.c.l.b16 %v1822
          %v1846 = vunpack.c.l.b16 %v1823
          %v1847 = vunpack.c.l.b16 %v1824
          %v1848 = vpack.c.b16 %v1845, %v1844
          %v1849 = vpack.c.b16 %v1847, %v1846
          %v1853 = vsel %vm929, %v1839, 0
          %1855 = vmatprep.subr.bf16.mxu0 0
          %1856 = vmatpush1.bf16.msra.mxu0 %v1848
          %1857 = vmatprep.subr.bf16.mxu0 0
          %1858 = vmatpush1.bf16.msra.mxu0 %v1849
          %1859 = vmatprep.subr.bf16.mxu0 0
          %1860 = vmatpush1.bf16.msra.mxu0 0
          %1861 = vmatprep.subr.bf16.mxu0 0
          %1862 = vmatpush1.bf16.msra.mxu0 0
          %1863 = vmatprep.subr.bf16.mxu0 0
          %1864 = vmatpush1.bf16.msra.mxu0 0
          %1865 = vmatprep.subr.bf16.mxu0 0
          %1866 = vmatpush1.bf16.msra.mxu0 0
          %1867 = vmatprep.subr.bf16.mxu0 0
          %1868 = vmatpush1.bf16.msra.mxu0 0
          %1869 = vmatprep.subr.bf16.mxu0 0
          %1870 = vmatpush1.bf16.msra.mxu0 0
          %1871 = vmatprep.subr.bf16.mxu0 0
          %1872 = vmatpush1.bf16.msra.mxu0 0
          %1873 = vmatprep.subr.bf16.mxu0 0
          %1874 = vmatpush1.bf16.msra.mxu0 0
          %1875 = vmatprep.subr.bf16.mxu0 0
          %1876 = vmatpush1.bf16.msra.mxu0 0
          %1877 = vmatprep.subr.bf16.mxu0 0
          %1878 = vmatpush1.bf16.msra.mxu0 0
          %1879 = vmatprep.subr.bf16.mxu0 0
          %1880 = vmatpush1.bf16.msra.mxu0 0
          %1881 = vmatprep.subr.bf16.mxu0 0
          %1882 = vmatpush1.bf16.msra.mxu0 0
          %1883 = vmatprep.subr.bf16.mxu0 0
          %1884 = vmatpush1.bf16.msra.mxu0 0
          %1885 = vmatprep.subr.bf16.mxu0 0
          %1886 = vmatpush1.bf16.msra.mxu0 0
          %1887 = vmatprep.mubr.bf16.mxu0 0
          %1888 = vmatmul.mubr.bf16.gmra.mrb[0].mxu0 %v1853
          %v1889 = vpop.f32.mrb[0].mxu0
          %v1890 = vadd.f32 %v1830, %v1889
          %v1891 = vpop.f32.mrb[0].mxu0
          %v1892 = vpop.f32.mrb[0].mxu0
          %v1893 = vpop.f32.mrb[0].mxu0
          %1894 = vdwg.mxu0
          %v1895 = vtanh.pop %v1890
          %v1896 = vpack.c.bf16 %v1895, %v1895
          %v1897 = vld [vmem:[%s18] sm:$0xf]
          %v1898 = vld [vmem:[%s18 + $0x4] sm:$0xf]
          %v1899 = vld [vmem:[%s18 + $0x8] sm:$0xf]
          %v1900 = vld [vmem:[%s18 + $0xc] sm:$0xf]
          %v1901 = vld [vmem:[%s19] sm:$0x1]
          %v1903 = vlaneseq
          %v1904 = vshrl.u32 %v1903, 7
          %v1905 = vsub.s32 0, %v1904
          %v1906 = vrot.slane %v1901, %v1905
          %v1912 = vunpack.c.l.b16 %v1897
          %v1913 = vunpack.c.l.b16 %v1898
          %v1914 = vunpack.c.l.b16 %v1899
          %v1915 = vunpack.c.l.b16 %v1900
          %v1916 = vpack.c.b16 %v1913, %v1912
          %v1917 = vpack.c.b16 %v1915, %v1914
          %v1921 = vsel %vm929, %v1896, 0
          %1923 = vmatprep.subr.bf16.mxu0 0
          %1924 = vmatpush1.bf16.msra.mxu0 %v1916
          %1925 = vmatprep.subr.bf16.mxu0 0
          %1926 = vmatpush1.bf16.msra.mxu0 %v1917
          %1927 = vmatprep.subr.bf16.mxu0 0
          %1928 = vmatpush1.bf16.msra.mxu0 0
          %1929 = vmatprep.subr.bf16.mxu0 0
          %1930 = vmatpush1.bf16.msra.mxu0 0
          %1931 = vmatprep.subr.bf16.mxu0 0
          %1932 = vmatpush1.bf16.msra.mxu0 0
          %1933 = vmatprep.subr.bf16.mxu0 0
          %1934 = vmatpush1.bf16.msra.mxu0 0
          %1935 = vmatprep.subr.bf16.mxu0 0
          %1936 = vmatpush1.bf16.msra.mxu0 0
          %1937 = vmatprep.subr.bf16.mxu0 0
          %1938 = vmatpush1.bf16.msra.mxu0 0
          %1939 = vmatprep.subr.bf16.mxu0 0
          %1940 = vmatpush1.bf16.msra.mxu0 0
          %1941 = vmatprep.subr.bf16.mxu0 0
          %1942 = vmatpush1.bf16.msra.mxu0 0
          %1943 = vmatprep.subr.bf16.mxu0 0
          %1944 = vmatpush1.bf16.msra.mxu0 0
          %1945 = vmatprep.subr.bf16.mxu0 0
          %1946 = vmatpush1.bf16.msra.mxu0 0
          %1947 = vmatprep.subr.bf16.mxu0 0
          %1948 = vmatpush1.bf16.msra.mxu0 0
          %1949 = vmatprep.subr.bf16.mxu0 0
          %1950 = vmatpush1.bf16.msra.mxu0 0
          %1951 = vmatprep.subr.bf16.mxu0 0
          %1952 = vmatpush1.bf16.msra.mxu0 0
          %1953 = vmatprep.subr.bf16.mxu0 0
          %1954 = vmatpush1.bf16.msra.mxu0 0
          %1955 = vmatprep.mubr.bf16.mxu0 0
          %1956 = vmatmul.mubr.bf16.gmra.mrb[0].mxu0 %v1921
          %v1957 = vpop.f32.mrb[0].mxu0
          %v1958 = vadd.f32 %v1906, %v1957
          %v1959 = vpop.f32.mrb[0].mxu0
          %v1960 = vpop.f32.mrb[0].mxu0
          %v1961 = vpop.f32.mrb[0].mxu0
          %1962 = vdwg.mxu0
          %v1963 = vtanh.pop %v1958
          %v1964 = vpack.c.bf16 %v1963, %v1963
          %v1965 = vld [vmem:[%s20] sm:$0xf]
          %v1966 = vld [vmem:[%s20 + $0x4] sm:$0xf]
          %v1967 = vld [vmem:[%s21] sm:$0x1]
          %v1969 = vlaneseq
          %v1970 = vshrl.u32 %v1969, 7
          %v1971 = vsub.s32 0, %v1970
          %v1972 = vrot.slane %v1967, %v1971
          %v1976 = vunpack.c.l.b16 %v1965
          %v1977 = vunpack.c.l.b16 %v1966
          %v1978 = vpack.c.b16 %v1977, %v1976
          %v1981 = vsel %vm1003, %v1964, 0
          %1983 = vmatprep.subr.bf16.mxu0 0
          %1984 = vmatpush1.bf16.msra.mxu0 %v1978
          %1985 = vmatprep.subr.bf16.mxu0 0
          %1986 = vmatpush1.bf16.msra.mxu0 0
          %1987 = vmatprep.subr.bf16.mxu0 0
          %1988 = vmatpush1.bf16.msra.mxu0 0
          %1989 = vmatprep.subr.bf16.mxu0 0
          %1990 = vmatpush1.bf16.msra.mxu0 0
          %1991 = vmatprep.subr.bf16.mxu0 0
          %1992 = vmatpush1.bf16.msra.mxu0 0
          %1993 = vmatprep.subr.bf16.mxu0 0
          %1994 = vmatpush1.bf16.msra.mxu0 0
          %1995 = vmatprep.subr.bf16.mxu0 0
          %1996 = vmatpush1.bf16.msra.mxu0 0
          %1997 = vmatprep.subr.bf16.mxu0 0
          %1998 = vmatpush1.bf16.msra.mxu0 0
          %1999 = vmatprep.subr.bf16.mxu0 0
          %2000 = vmatpush1.bf16.msra.mxu0 0
          %2001 = vmatprep.subr.bf16.mxu0 0
          %2002 = vmatpush1.bf16.msra.mxu0 0
          %2003 = vmatprep.subr.bf16.mxu0 0
          %2004 = vmatpush1.bf16.msra.mxu0 0
          %2005 = vmatprep.subr.bf16.mxu0 0
          %2006 = vmatpush1.bf16.msra.mxu0 0
          %2007 = vmatprep.subr.bf16.mxu0 0
          %2008 = vmatpush1.bf16.msra.mxu0 0
          %2009 = vmatprep.subr.bf16.mxu0 0
          %2010 = vmatpush1.bf16.msra.mxu0 0
          %2011 = vmatprep.subr.bf16.mxu0 0
          %2012 = vmatpush1.bf16.msra.mxu0 0
          %2013 = vmatprep.subr.bf16.mxu0 0
          %2014 = vmatpush1.bf16.msra.mxu0 0
          %2015 = vmatprep.mubr.bf16.mxu0 0
          %2016 = vmatmul.mubr.bf16.gmra.mrb[0].mxu0 %v1981
          %v2017 = vpop.f32.mrb[0].mxu0
          %v2018 = vadd.f32 %v1972, %v2017
          %v2019 = vpop.f32.mrb[0].mxu0
          %v2020 = vpop.f32.mrb[0].mxu0
          %v2021 = vpop.f32.mrb[0].mxu0
          %2022 = vdwg.mxu0
          %vm2023 = vcmask 25600
          %v2024 = vsel %vm2023, %v2018, -inf
          %2025 = vmax.xlane.f32.xlu0 %v2024
          %v2026 = vpop.xlane.xlu0 %2025
          %v2027 = vsub.f32 %v2018, %v2026
          %v2028 = vmul.f32 %v2027, 1.442695
          %v2029 = vpow.pop %v2028
          %v2030 = vsel %vm2023, %v2029, 0.0
          %2031 = vadd.xlane.f32.xlu0 %v2030
          %v2032 = vpop.xlane.xlu0 %2031
          %v2033 = vlog2.pop %v2032
          %v2034 = vmul.f32 %v2033, 0.6931472
          %v2035 = vsub.f32 %v2027, %v2034
          %2036 = vst.msk [vmem:[#allocation3] sm:$0x3] %vm2023, %v2035
        $region116: #{base_bert_forward.1} parent=107 // pred_fallthru
          _
        // Predicated region
        $region117: #{base_bert_forward.1} parent=107 // pred_check
          %p2037 = pneg %p569
        $region118: #{base_bert_forward.1} parent=107 // pred_check_branch
          %2039 = sbr.rel (%p2037) target = $region120
        $region119: #{base_bert_forward.1} parent=107 // pred_region
          %s2041 = ssub.s32 32, 32
          %2042 = vsyncadd [#allocation4], %s2041
          %s2044 = sshll.u32 [#allocation3], 4
          %s2045 = int_to_ptr.vmem [resolvable:$true] %s2044
          %2047 = dma.vmem_to_hbm [thread:$0]  %s2045, 32, %s22, [#allocation4]
        $region120: #{base_bert_forward.1} parent=107 // pred_fallthru
          _
        // Predicated region
        $region121: #{base_bert_forward.1} parent=107 // pred_check
          %p2048 = pneg %p569
        $region122: #{base_bert_forward.1} parent=107 // pred_check_branch
          %2050 = sbr.rel (%p2048) target = $region124
        $region123: #{base_bert_forward.1} parent=107 // pred_region
          %2051 = dma.done [#allocation4], 32
        $region124: #{base_bert_forward.1} parent=107 // pred_fallthru
          _
      $region108: #{base_bert_forward.1} parent=5 // pred_fallthru
        _
      %p2052 = scmp.le.s32.totalorder 2, %s29
      // Predicated region
      $region125: #{base_bert_forward.1} parent=5 // pred_check
        %p2053 = pneg %p2052
      $region126: #{base_bert_forward.1} parent=5 // pred_check_branch
        %2055 = sbr.rel (%p2053) target = $region128
      $region127: #{base_bert_forward.1} parent=5 // pred_region
        %s2056 = ssub.s32 %s29, 2
      $region128: #{base_bert_forward.1} parent=5 // pred_fallthru
        _
    $region6: #{base_bert_forward.1} parent=1 // loop_footer
      %s33 = sadd.s32 1, %s29
    $region7: #{base_bert_forward.1} parent=1 // loop_footer_branch
      %28 = sbr.rel target = $region3
    $region8: #{base_bert_forward.1} parent=1 // loop_exit
      _
    %2057 = vsyncpa [#allocation4], 1
    %s2058 = scalar_lea.sflag [#allocation4], 1
    %2059 = vsyncpa %s2058, 1

</llo_original>
